<compile_context>
chip_gen: v5e
topology: v5e:2x2
jax: 0.10.0
libtpu: 0.0.40
codegen_flags: <defaults>
</compile_context>

<pallas_src>
import functools
import numpy as np

import jax
import jax.numpy as jnp
from jax.experimental import pallas as pl
from jax.experimental.pallas import tpu as pltpu

LN_EPS = 1e-6

# ------------------------- model hyper-parameters --------------------------
N_VOCAB    = 50
D_MODEL    = 32        # = d_word_vec
N_LAYERS   = 2
N_HEAD     = 2
D_K        = 16
D_V        = 16
D_INNER    = 64
PAD_IDX    = 0
N_POSITION = 200
SCALE_EMB  = False

B   = 2                # batch
L_T = 8                # target (decoder) sequence length
L_S = 10               # source (encoder) sequence length


# ------------------------------ helpers ------------------------------------
def sinusoid_table(n_position, d_hid):
    """Exactly the reference sinusoid positional-encoding table."""
    def angle_vec(pos):
        return [pos / np.power(10000, 2 * (j // 2) / d_hid) for j in range(d_hid)]
    tab = np.array([angle_vec(p) for p in range(n_position)], dtype=np.float64)
    tab[:, 0::2] = np.sin(tab[:, 0::2])
    tab[:, 1::2] = np.cos(tab[:, 1::2])
    return jnp.asarray(tab, dtype=jnp.float32)          # (n_position, d_hid)


# --------------------------- fused decoder kernel ---------------------------
def decoder_kernel(x_ref, encw_ref, sbias_ref, ebias_ref, ln0_ref,
                   wqk_ref, wvo_ref, w1_ref, w2_ref, vec_ref, b1_ref,
                   o_ref, xw_ref,
                   *, n_layers, n_head, n_rows, d_model):
    H, R, D = n_head, n_rows, d_model          # R = B * Lq (token rows)

    def mm(a, b):
        return jnp.dot(a, b, preferred_element_type=jnp.float32)

    def contract_last(a, b):
        # (m, c) x (n, c) -> (m, n) without materializing a transpose
        return jax.lax.dot_general(a, b, (((1,), (1,)), ((), ())),
                                   preferred_element_type=jnp.float32)

    def softmax(s):
        m = jnp.max(s, axis=-1, keepdims=True)
        p = jnp.exp(s - m)                                             # EUP
        return p * pl.reciprocal(jnp.sum(p, axis=-1, keepdims=True), approx=True)

    def ln(v, g, b):
        mu = jnp.mean(v, axis=-1, keepdims=True)
        var = jnp.mean(jnp.square(v - mu), axis=-1, keepdims=True)
        return (v - mu) * jax.lax.rsqrt(var + LN_EPS) * g + b

    def stack_wide(v):
        # Scatter the (B*Lq, D) token slab into the block-structured wide layout:
        # row (h, b, q) holds x[b, q] in lanes h*D:(h+1)*D and zeros elsewhere.
        # Off-block zeros were written once before the layer loop and never change.
        for h in range(H):
            xw_ref[h * R:(h + 1) * R, h * D:(h + 1) * D] = v

    def attention(qw, kw, bias, wqk, wvo):
        # qw: (H*R, H*D) wide queries; kw: (H*Rk, H*D) wide key/value source.
        # One matmul pair yields scores for every (head, batch) block at once;
        # wrong-block entries are killed by the precomputed additive bias.
        s = contract_last(mm(qw, wqk), kw) + bias            # (H*R, H*Rk)
        ctx = mm(softmax(s), mm(kw, wvo))                    # (H*R, D), Wo folded in
        out = ctx[0:R]
        for h in range(1, H):                                # sum heads (sublane halves)
            out = out + ctx[h * R:(h + 1) * R]
        return out

    ln0 = ln0_ref[...]
    sbias = sbias_ref[...]
    ebias = ebias_ref[...]
    encw = encw_ref[...]

    # dropout == identity (inference); embedding + positional add done in wrapper.
    x = ln(x_ref[...], ln0[0:1], ln0[1:2])                   # (B*Lq, D)

    xw_ref[...] = jnp.zeros_like(xw_ref)                     # zero off-diagonal blocks once

    for l in range(n_layers):                                # static unroll (N_LAYERS = 2)
        vecs = vec_ref[l]                                    # (8, D) packed LN / bias rows

        # ---- masked multi-head self attention -------------------------------
        stack_wide(x)
        xw = xw_ref[...]
        x = ln(attention(xw, xw, sbias, wqk_ref[2 * l], wvo_ref[2 * l]) + x,
               vecs[0:1], vecs[1:2])

        # ---- encoder-decoder attention ---------------------------------------
        stack_wide(x)
        xw = xw_ref[...]
        x = ln(attention(xw, encw, ebias, wqk_ref[2 * l + 1], wvo_ref[2 * l + 1]) + x,
               vecs[2:3], vecs[3:4])

        # ---- position-wise FFN ------------------------------------------------
        hdn = jnp.maximum(mm(x, w1_ref[l]) + b1_ref[l], 0.0)
        x = ln(mm(hdn, w2_ref[l]) + vecs[6:7] + x, vecs[4:5], vecs[5:6])

    o_ref[...] = x


# ------------------------------ Pallas wrapper ------------------------------
def _full_spec(shape):
    nd = len(shape)
    return pl.BlockSpec(tuple(shape), lambda i: (0,) * nd)


def build_block_bias(mask, n_head):
    """(B, Lq, Lk) 0/1 mask -> additive bias for the (head, batch)-stacked score
    matrix of shape (H*B*Lq, H*B*Lk).  In-block masked entries get -1e9 (same as
    the reference); cross-(head, batch) blocks get -1e30 so they can never win
    the softmax, even for fully data-masked query rows."""
    Bx, Lq, Lk = mask.shape
    H = n_head
    data = jnp.where(mask > 0, 0.0, -1e9).astype(jnp.float32)          # (B, Lq, Lk)
    hr = jnp.arange(H).reshape(H, 1, 1, 1, 1, 1)
    br = jnp.arange(Bx).reshape(1, Bx, 1, 1, 1, 1)
    hc = jnp.arange(H).reshape(1, 1, 1, H, 1, 1)
    bc = jnp.arange(Bx).reshape(1, 1, 1, 1, Bx, 1)
    same = (hr == hc) & (br == bc)
    bias = jnp.where(same, data[None, :, :, None, None, :], jnp.float32(-1e30))
    bias = jnp.broadcast_to(bias, (H, Bx, Lq, H, Bx, Lk))
    return bias.reshape(H * Bx * Lq, H * Bx * Lk).astype(jnp.float32)


def decoder_forward(params, packed, trg_seq, trg_mask, enc_output, src_mask):
    # embedding gather + positional encoding (plain-JAX glue, fused by XLA)
    x = jnp.take(params["emb"], trg_seq, axis=0).astype(jnp.float32)   # (B, Lq, D)
    if SCALE_EMB:
        x = x * (D_MODEL ** 0.5)
    Bx, Lq, D = x.shape
    Ls = enc_output.shape[1]
    H = N_HEAD
    x = x + params["pos_table"][:Lq][None]
    x2 = x.reshape(Bx * Lq, D)                                         # token-major slab

    # encoder output in the block-structured wide layout (layout only, no compute)
    enc_flat = enc_output.astype(jnp.float32).reshape(Bx * Ls, D)
    encw = jnp.zeros((H * Bx * Ls, H * D), jnp.float32)
    for h in range(H):
        encw = encw.at[h * Bx * Ls:(h + 1) * Bx * Ls, h * D:(h + 1) * D].set(enc_flat)

    # additive biases over the stacked score matrices (data mask + block mask)
    slf_mask = jnp.broadcast_to(trg_mask.astype(jnp.float32), (Bx, Lq, Lq))
    enc_mask = jnp.broadcast_to(src_mask.astype(jnp.float32), (Bx, Lq, Ls))
    sbias = build_block_bias(slf_mask, H)                              # (H*B*Lq, H*B*Lq)
    ebias = build_block_bias(enc_mask, H)                              # (H*B*Lq, H*B*Ls)

    kernel = functools.partial(
        decoder_kernel, n_layers=N_LAYERS, n_head=H, n_rows=Bx * Lq, d_model=D)

    args = (x2, encw, sbias, ebias, packed["ln0"],
            packed["wqk"], packed["wvo"], packed["w1"], packed["w2"],
            packed["vecs"], packed["b1"])

    out2 = pl.pallas_call(
        kernel,
        out_shape=jax.ShapeDtypeStruct((Bx * Lq, D), jnp.float32),
        grid=(1,),
        in_specs=[_full_spec(a.shape) for a in args],
        out_specs=_full_spec((Bx * Lq, D)),
        scratch_shapes=[pltpu.VMEM((H * Bx * Lq, H * D), jnp.float32)],
        compiler_params=pltpu.CompilerParams(
            dimension_semantics=("arbitrary",)),
    )(*args)
    return out2.reshape(Bx, Lq, D)


# -------------------- parameter packing for the fused kernel ----------------
def pack_params(params):
    """One-time preprocessing: fold Wq·Wkᵀ (with 1/sqrt(d_k)) and Wv·Wo per head,
    stack per-layer weights, and pack every small LN/bias vector into one slab."""
    inv_temp = 1.0 / np.sqrt(D_K)

    def head_rows(w, dh):                         # (D, H*dh) -> (H*D, dh)
        return jnp.concatenate(
            [w[:, h * dh:(h + 1) * dh] for h in range(N_HEAD)], axis=0)

    wqk, wvo, w1, b1, w2, vecs = [], [], [], [], [], []
    for layer in params["layers"]:
        for att in (layer["slf"], layer["enc"]):
            q = head_rows(att["wq"], D_K) * inv_temp          # (H*D, d_k)
            k = head_rows(att["wk"], D_K)                     # (H*D, d_k)
            wqk.append(q @ k.T)                               # (H*D, H*D)
            wvo.append(jnp.concatenate(
                [att["wv"][:, h * D_V:(h + 1) * D_V] @ att["wo"][h * D_V:(h + 1) * D_V, :]
                 for h in range(N_HEAD)], axis=0))            # (H*D, D)
        w1.append(layer["ffn"]["w1"])
        b1.append(layer["ffn"]["b1"])
        w2.append(layer["ffn"]["w2"])
        vecs.append(jnp.concatenate([
            layer["slf"]["g"], layer["slf"]["b"],
            layer["enc"]["g"], layer["enc"]["b"],
            layer["ffn"]["g"], layer["ffn"]["b"], layer["ffn"]["b2"],
            jnp.zeros((1, D_MODEL), jnp.float32)], axis=0))   # (8, D)

    return {
        "wqk": jnp.stack(wqk),          # (2*n_layers, H*D, H*D)   [2l]=slf, [2l+1]=enc
        "wvo": jnp.stack(wvo),          # (2*n_layers, H*D, D)
        "w1": jnp.stack(w1),            # (n_layers, D, D_INNER)
        "b1": jnp.stack(b1),            # (n_layers, 1, D_INNER)
        "w2": jnp.stack(w2),            # (n_layers, D_INNER, D)
        "vecs": jnp.stack(vecs),        # (n_layers, 8, D)
        "ln0": jnp.concatenate([params["ln_g"], params["ln_b"]], axis=0),  # (2, D)
    }


# ------------------------ pure-JAX reference (checking) ---------------------
def ref_decoder(params, trg_seq, trg_mask, enc_output, src_mask):
    def ln(x, g, b):
        mu = x.mean(-1, keepdims=True)
        var = ((x - mu) ** 2).mean(-1, keepdims=True)
        return (x - mu) / jnp.sqrt(var + LN_EPS) * g + b

    def mha(qx, kvx, mask, p):
        Bx, Lq, _ = qx.shape
        Lk = kvx.shape[1]
        q = (qx @ p["wq"]).reshape(Bx, Lq, N_HEAD, D_K).transpose(0, 2, 1, 3)
        k = (kvx @ p["wk"]).reshape(Bx, Lk, N_HEAD, D_K).transpose(0, 2, 1, 3)
        v = (kvx @ p["wv"]).reshape(Bx, Lk, N_HEAD, D_V).transpose(0, 2, 1, 3)
        sc = jnp.einsum("bhqd,bhkd->bhqk", q, k) / np.sqrt(D_K)
        sc = jnp.where(mask[:, None, :, :] == 0.0, -1e9, sc)
        attn = jax.nn.softmax(sc, axis=-1)
        ctx = jnp.einsum("bhqk,bhkd->bhqd", attn, v).transpose(0, 2, 1, 3)
        ctx = ctx.reshape(Bx, Lq, N_HEAD * D_V)
        out = ctx @ p["wo"] + qx
        return ln(out, p["g"], p["b"])

    def ffn(x, p):
        h = jnp.maximum(x @ p["w1"] + p["b1"], 0.0)
        y = h @ p["w2"] + p["b2"] + x
        return ln(y, p["g"], p["b"])

    x = jnp.take(params["emb"], trg_seq, axis=0)
    if SCALE_EMB:
        x = x * (D_MODEL ** 0.5)
    Lq = trg_seq.shape[1]
    x = ln(x + params["pos_table"][:Lq][None], params["ln_g"], params["ln_b"])
    Bx = x.shape[0]
    Ls = enc_output.shape[1]
    slf_mask = jnp.broadcast_to(trg_mask.astype(jnp.float32), (Bx, Lq, Lq))
    enc_mask = jnp.broadcast_to(src_mask.astype(jnp.float32), (Bx, Lq, Ls))
    for layer in params["layers"]:
        x = mha(x, x, slf_mask, layer["slf"])
        x = mha(x, enc_output, enc_mask, layer["enc"])
        x = ffn(x, layer["ffn"])
    return x


# ------------------------------ parameter init ------------------------------
def make_params(key):
    keys = jax.random.split(key, 1 + N_LAYERS)
    emb = jax.random.normal(keys[0], (N_VOCAB, D_MODEL), jnp.float32) * 0.02
    emb = emb.at[PAD_IDX].set(0.0)                 # padding_idx row = 0

    params = {
        "emb": emb,
        "pos_table": sinusoid_table(N_POSITION, D_MODEL),
        "ln_g": jnp.ones((1, D_MODEL), jnp.float32),
        "ln_b": jnp.zeros((1, D_MODEL), jnp.float32),
        "layers": [],
    }

    def w(k, shape):
        return jax.random.normal(k, shape, jnp.float32) * 0.02

    for li in range(N_LAYERS):
        lk = jax.random.split(keys[1 + li], 10)
        attn_p = lambda ks: {
            "wq": w(ks[0], (D_MODEL, N_HEAD * D_K)),
            "wk": w(ks[1], (D_MODEL, N_HEAD * D_K)),
            "wv": w(ks[2], (D_MODEL, N_HEAD * D_V)),
            "wo": w(ks[3], (N_HEAD * D_V, D_MODEL)),
            "g": jnp.ones((1, D_MODEL), jnp.float32),
            "b": jnp.zeros((1, D_MODEL), jnp.float32),
        }
        layer = {
            "slf": attn_p(lk[0:4]),
            "enc": attn_p(lk[4:8]),
            "ffn": {
                "w1": w(lk[8], (D_MODEL, D_INNER)),
                "b1": jnp.zeros((1, D_INNER), jnp.float32),
                "w2": w(lk[9], (D_INNER, D_MODEL)),
                "b2": jnp.zeros((1, D_MODEL), jnp.float32),
                "g": jnp.ones((1, D_MODEL), jnp.float32),
                "b": jnp.zeros((1, D_MODEL), jnp.float32),
            },
        }
        params["layers"].append(layer)
    return params


# ----------------------------------- main ------------------------------------
if __name__ == "__main__":
    root = jax.random.PRNGKey(0)
    k_par, k_trg, k_enc = jax.random.split(root, 3)

    params = make_params(k_par)
    packed = pack_params(params)          # one-time weight fusion / stacking

    # target token ids, with a couple of PAD tokens at the tail of batch 1
    trg_seq = jax.random.randint(k_trg, (B, L_T), 1, N_VOCAB, dtype=jnp.int32)
    trg_seq = trg_seq.at[1, -2:].set(PAD_IDX)

    # trg_mask = pad mask & causal (subsequent) mask  -> (B, L_T, L_T)
    pad_mask = (trg_seq != PAD_IDX).astype(jnp.float32)[:, None, :]      # (B,1,L)
    causal = jnp.tril(jnp.ones((L_T, L_T), jnp.float32))[None]           # (1,L,L)
    trg_mask = pad_mask * causal                                         # (B,L,L)

    # encoder output + src mask (last 2 source positions of batch 1 padded)
    enc_output = jax.random.normal(k_enc, (B, L_S, D_MODEL), jnp.float32)
    src_mask = jnp.ones((B, 1, L_S), jnp.float32)
    src_mask = src_mask.at[1, 0, -2:].set(0.0)

    fwd = jax.jit(decoder_forward)
    out = fwd(params, packed, trg_seq, trg_mask, enc_output, src_mask)
    out = jax.block_until_ready(out)

    ref = ref_decoder(params, trg_seq, trg_mask, enc_output, src_mask)
    ref = jax.block_until_ready(ref)

    assert out.shape == (B, L_T, D_MODEL)
    assert bool(jnp.all(jnp.isfinite(out)))
    np.testing.assert_allclose(np.asarray(out), np.asarray(ref), rtol=1e-2, atol=1e-2)

    print("KERNEL_OK")
</pallas_src>

<mosaic_0001>
module attributes {stable_mosaic.version = 11 : i64} {
  func.func @decoder_kernel(%arg0: i32, %arg1: memref<16x32xf32, #tpu.memory_space<vmem>>, %arg2: memref<40x64xf32, #tpu.memory_space<vmem>>, %arg3: memref<32x32xf32, #tpu.memory_space<vmem>>, %arg4: memref<32x40xf32, #tpu.memory_space<vmem>>, %arg5: memref<2x32xf32, #tpu.memory_space<vmem>>, %arg6: memref<4x64x64xf32, #tpu.memory_space<vmem>>, %arg7: memref<4x64x32xf32, #tpu.memory_space<vmem>>, %arg8: memref<2x32x64xf32, #tpu.memory_space<vmem>>, %arg9: memref<2x64x32xf32, #tpu.memory_space<vmem>>, %arg10: memref<2x8x32xf32, #tpu.memory_space<vmem>>, %arg11: memref<2x1x64xf32, #tpu.memory_space<vmem>>, %arg12: memref<16x32xf32, #tpu.memory_space<vmem>>, %arg13: memref<32x64xf32, #tpu.memory_space<vmem>>) attributes {dimension_semantics = [#tpu.dimension_semantics<arbitrary>], iteration_bounds = array<i64: 1>, scalar_prefetch = 0 : i64, scratch_operands = 1 : i64, tpu.core_type = #tpu.core_type<tc>, window_params = [{pipeline_mode = #tpu.pipeline_mode<synchronous>, transform_indices = @transform_0, window_bounds = array<i64: 16, 32>}, {pipeline_mode = #tpu.pipeline_mode<synchronous>, transform_indices = @transform_1, window_bounds = array<i64: 40, 64>}, {pipeline_mode = #tpu.pipeline_mode<synchronous>, transform_indices = @transform_2, window_bounds = array<i64: 32, 32>}, {pipeline_mode = #tpu.pipeline_mode<synchronous>, transform_indices = @transform_3, window_bounds = array<i64: 32, 40>}, {pipeline_mode = #tpu.pipeline_mode<synchronous>, transform_indices = @transform_4, window_bounds = array<i64: 2, 32>}, {pipeline_mode = #tpu.pipeline_mode<synchronous>, transform_indices = @transform_5, window_bounds = array<i64: 4, 64, 64>}, {pipeline_mode = #tpu.pipeline_mode<synchronous>, transform_indices = @transform_6, window_bounds = array<i64: 4, 64, 32>}, {pipeline_mode = #tpu.pipeline_mode<synchronous>, transform_indices = @transform_7, window_bounds = array<i64: 2, 32, 64>}, {pipeline_mode = #tpu.pipeline_mode<synchronous>, transform_indices = @transform_8, window_bounds = array<i64: 2, 64, 32>}, {pipeline_mode = #tpu.pipeline_mode<synchronous>, transform_indices = @transform_9, window_bounds = array<i64: 2, 8, 32>}, {pipeline_mode = #tpu.pipeline_mode<synchronous>, transform_indices = @transform_10, window_bounds = array<i64: 2, 1, 64>}, {pipeline_mode = #tpu.pipeline_mode<synchronous>, transform_indices = @transform_11, window_bounds = array<i64: 16, 32>}]} {
    %c0 = arith.constant 0 : index
    %c0_0 = arith.constant 0 : index
    %0 = vector.load %arg5[%c0, %c0_0] : memref<2x32xf32, #tpu.memory_space<vmem>>, vector<2x32xf32>
    %c0_1 = arith.constant 0 : index
    %c0_2 = arith.constant 0 : index
    %1 = vector.load %arg3[%c0_1, %c0_2] : memref<32x32xf32, #tpu.memory_space<vmem>>, vector<32x32xf32>
    %c0_3 = arith.constant 0 : index
    %c0_4 = arith.constant 0 : index
    %2 = vector.load %arg4[%c0_3, %c0_4] : memref<32x40xf32, #tpu.memory_space<vmem>>, vector<32x40xf32>
    %c0_5 = arith.constant 0 : index
    %c0_6 = arith.constant 0 : index
    %3 = vector.load %arg2[%c0_5, %c0_6] : memref<40x64xf32, #tpu.memory_space<vmem>>, vector<40x64xf32>
    %c0_7 = arith.constant 0 : index
    %c0_8 = arith.constant 0 : index
    %4 = vector.load %arg1[%c0_7, %c0_8] : memref<16x32xf32, #tpu.memory_space<vmem>>, vector<16x32xf32>
    %5 = vector.extract_strided_slice %0 {offsets = [0, 0], sizes = [1, 32], strides = [1, 1]} : vector<2x32xf32> to vector<1x32xf32>
    %6 = vector.extract_strided_slice %0 {offsets = [1, 0], sizes = [1, 32], strides = [1, 1]} : vector<2x32xf32> to vector<1x32xf32>
    %cst = arith.constant dense<0.000000e+00> : vector<16xf32>
    %7 = vector.multi_reduction <add>, %4, %cst [1] : vector<16x32xf32> to vector<16xf32>
    %8 = vector.shape_cast %7 : vector<16xf32> to vector<16x1xf32>
    %cst_9 = arith.constant 3.200000e+01 : f32
    %9 = vector.broadcast %cst_9 : f32 to vector<16x1xf32>
    %10 = arith.divf %8, %9 : vector<16x1xf32>
    %11 = vector.broadcast %10 : vector<16x1xf32> to vector<16x32xf32>
    %12 = arith.subf %4, %11 : vector<16x32xf32>
    %13 = arith.mulf %12, %12 : vector<16x32xf32>
    %cst_10 = arith.constant dense<0.000000e+00> : vector<16xf32>
    %14 = vector.multi_reduction <add>, %13, %cst_10 [1] : vector<16x32xf32> to vector<16xf32>
    %15 = vector.shape_cast %14 : vector<16xf32> to vector<16x1xf32>
    %cst_11 = arith.constant 3.200000e+01 : f32
    %16 = vector.broadcast %cst_11 : f32 to vector<16x1xf32>
    %17 = arith.divf %15, %16 : vector<16x1xf32>
    %18 = vector.broadcast %10 : vector<16x1xf32> to vector<16x32xf32>
    %19 = arith.subf %4, %18 : vector<16x32xf32>
    %cst_12 = arith.constant 9.99999997E-7 : f32
    %20 = vector.broadcast %cst_12 : f32 to vector<16x1xf32>
    %21 = arith.addf %17, %20 : vector<16x1xf32>
    %22 = math.rsqrt %21 : vector<16x1xf32>
    %23 = vector.broadcast %22 : vector<16x1xf32> to vector<16x32xf32>
    %24 = arith.mulf %19, %23 : vector<16x32xf32>
    %25 = vector.broadcast %5 : vector<1x32xf32> to vector<16x32xf32>
    %26 = arith.mulf %24, %25 : vector<16x32xf32>
    %27 = vector.broadcast %6 : vector<1x32xf32> to vector<16x32xf32>
    %28 = arith.addf %26, %27 : vector<16x32xf32>
    %cst_13 = arith.constant 0.000000e+00 : f32
    %29 = vector.broadcast %cst_13 : f32 to vector<32x64xf32>
    %c0_14 = arith.constant 0 : index
    %c0_15 = arith.constant 0 : index
    %30 = vector.load %arg13[%c0_14, %c0_15] : memref<32x64xf32, #tpu.memory_space<vmem>>, vector<32x64xf32>
    tpu.vector_store %arg13[%c0_14, %c0_15], %29 {strides = array<i32>} : memref<32x64xf32, #tpu.memory_space<vmem>>, vector<32x64xf32>,
    %c0_16 = arith.constant 0 : index
    %c0_17 = arith.constant 0 : index
    %c0_18 = arith.constant 0 : index
    %31 = vector.load %arg10[%c0_16, %c0_17, %c0_18] : memref<2x8x32xf32, #tpu.memory_space<vmem>>, vector<1x8x32xf32>
    %32 = vector.shape_cast %31 : vector<1x8x32xf32> to vector<8x32xf32>
    %c0_19 = arith.constant 0 : index
    %c0_20 = arith.constant 0 : index
    %33 = vector.load %arg13[%c0_19, %c0_20] : memref<32x64xf32, #tpu.memory_space<vmem>>, vector<16x32xf32>
    tpu.vector_store %arg13[%c0_19, %c0_20], %28 {strides = array<i32>} : memref<32x64xf32, #tpu.memory_space<vmem>>, vector<16x32xf32>,
    %c16 = arith.constant 16 : index
    %c32 = arith.constant 32 : index
    %34 = vector.load %arg13[%c16, %c32] : memref<32x64xf32, #tpu.memory_space<vmem>>, vector<16x32xf32>
    tpu.vector_store %arg13[%c16, %c32], %28 {strides = array<i32>} : memref<32x64xf32, #tpu.memory_space<vmem>>, vector<16x32xf32>,
    %c0_21 = arith.constant 0 : index
    %c0_22 = arith.constant 0 : index
    %35 = vector.load %arg13[%c0_21, %c0_22] : memref<32x64xf32, #tpu.memory_space<vmem>>, vector<32x64xf32>
    %c0_23 = arith.constant 0 : index
    %c0_24 = arith.constant 0 : index
    %c0_25 = arith.constant 0 : index
    %36 = vector.load %arg6[%c0_23, %c0_24, %c0_25] : memref<4x64x64xf32, #tpu.memory_space<vmem>>, vector<1x64x64xf32>
    %37 = vector.shape_cast %36 : vector<1x64x64xf32> to vector<64x64xf32>
    %c0_26 = arith.constant 0 : index
    %c0_27 = arith.constant 0 : index
    %c0_28 = arith.constant 0 : index
    %38 = vector.load %arg7[%c0_26, %c0_27, %c0_28] : memref<4x64x32xf32, #tpu.memory_space<vmem>>, vector<1x64x32xf32>
    %39 = vector.shape_cast %38 : vector<1x64x32xf32> to vector<64x32xf32>
    %cst_29 = arith.constant dense<0.000000e+00> : vector<32x64xf32>
    %40 = tpu.matmul %35, %37, %cst_29 {dimension_numbers = #tpu.dot_dimension_numbers<[1], [0], [0], [1], [0, 0, 1, 1], [], []>} : vector<32x64xf32>, vector<64x64xf32>, vector<32x64xf32> -> vector<32x64xf32>
    %cst_30 = arith.constant dense<0.000000e+00> : vector<32x32xf32>
    %41 = tpu.matmul %40, %35, %cst_30 {dimension_numbers = #tpu.dot_dimension_numbers<[1], [1], [0], [0], [0, 0, 1, 0], [], []>} : vector<32x64xf32>, vector<32x64xf32>, vector<32x32xf32> -> vector<32x32xf32>
    %42 = arith.addf %41, %1 : vector<32x32xf32>
    %cst_31 = arith.constant dense<0xFF800000> : vector<32xf32>
    %43 = vector.multi_reduction <maximumf>, %42, %cst_31 [1] : vector<32x32xf32> to vector<32xf32>
    %44 = vector.shape_cast %43 : vector<32xf32> to vector<32x1xf32>
    %45 = vector.broadcast %44 : vector<32x1xf32> to vector<32x32xf32>
    %46 = arith.subf %42, %45 : vector<32x32xf32>
    %47 = math.exp %46 : vector<32x32xf32>
    %cst_32 = arith.constant dense<0.000000e+00> : vector<32xf32>
    %48 = vector.multi_reduction <add>, %47, %cst_32 [1] : vector<32x32xf32> to vector<32xf32>
    %49 = vector.shape_cast %48 : vector<32xf32> to vector<32x1xf32>
    %50 = tpu.reciprocal %49 {approx = true} : vector<32x1xf32> -> vector<32x1xf32>
    %51 = vector.broadcast %50 : vector<32x1xf32> to vector<32x32xf32>
    %52 = arith.mulf %47, %51 : vector<32x32xf32>
    %cst_33 = arith.constant dense<0.000000e+00> : vector<32x32xf32>
    %53 = tpu.matmul %35, %39, %cst_33 {dimension_numbers = #tpu.dot_dimension_numbers<[1], [0], [0], [1], [0, 0, 1, 1], [], []>} : vector<32x64xf32>, vector<64x32xf32>, vector<32x32xf32> -> vector<32x32xf32>
    %cst_34 = arith.constant dense<0.000000e+00> : vector<32x32xf32>
    %54 = tpu.matmul %52, %53, %cst_34 {dimension_numbers = #tpu.dot_dimension_numbers<[1], [0], [0], [1], [0, 0, 1, 1], [], []>} : vector<32x32xf32>, vector<32x32xf32>, vector<32x32xf32> -> vector<32x32xf32>
    %55 = vector.extract_strided_slice %54 {offsets = [0, 0], sizes = [16, 32], strides = [1, 1]} : vector<32x32xf32> to vector<16x32xf32>
    %56 = vector.extract_strided_slice %54 {offsets = [16, 0], sizes = [16, 32], strides = [1, 1]} : vector<32x32xf32> to vector<16x32xf32>
    %57 = arith.addf %55, %56 : vector<16x32xf32>
    %58 = arith.addf %57, %28 : vector<16x32xf32>
    %59 = vector.extract_strided_slice %32 {offsets = [0, 0], sizes = [1, 32], strides = [1, 1]} : vector<8x32xf32> to vector<1x32xf32>
    %60 = vector.extract_strided_slice %32 {offsets = [1, 0], sizes = [1, 32], strides = [1, 1]} : vector<8x32xf32> to vector<1x32xf32>
    %cst_35 = arith.constant dense<0.000000e+00> : vector<16xf32>
    %61 = vector.multi_reduction <add>, %58, %cst_35 [1] : vector<16x32xf32> to vector<16xf32>
    %62 = vector.shape_cast %61 : vector<16xf32> to vector<16x1xf32>
    %cst_36 = arith.constant 3.200000e+01 : f32
    %63 = vector.broadcast %cst_36 : f32 to vector<16x1xf32>
    %64 = arith.divf %62, %63 : vector<16x1xf32>
    %65 = vector.broadcast %64 : vector<16x1xf32> to vector<16x32xf32>
    %66 = arith.subf %58, %65 : vector<16x32xf32>
    %67 = arith.mulf %66, %66 : vector<16x32xf32>
    %cst_37 = arith.constant dense<0.000000e+00> : vector<16xf32>
    %68 = vector.multi_reduction <add>, %67, %cst_37 [1] : vector<16x32xf32> to vector<16xf32>
    %69 = vector.shape_cast %68 : vector<16xf32> to vector<16x1xf32>
    %cst_38 = arith.constant 3.200000e+01 : f32
    %70 = vector.broadcast %cst_38 : f32 to vector<16x1xf32>
    %71 = arith.divf %69, %70 : vector<16x1xf32>
    %72 = vector.broadcast %64 : vector<16x1xf32> to vector<16x32xf32>
    %73 = arith.subf %58, %72 : vector<16x32xf32>
    %cst_39 = arith.constant 9.99999997E-7 : f32
    %74 = vector.broadcast %cst_39 : f32 to vector<16x1xf32>
    %75 = arith.addf %71, %74 : vector<16x1xf32>
    %76 = math.rsqrt %75 : vector<16x1xf32>
    %77 = vector.broadcast %76 : vector<16x1xf32> to vector<16x32xf32>
    %78 = arith.mulf %73, %77 : vector<16x32xf32>
    %79 = vector.broadcast %59 : vector<1x32xf32> to vector<16x32xf32>
    %80 = arith.mulf %78, %79 : vector<16x32xf32>
    %81 = vector.broadcast %60 : vector<1x32xf32> to vector<16x32xf32>
    %82 = arith.addf %80, %81 : vector<16x32xf32>
    %c0_40 = arith.constant 0 : index
    %c0_41 = arith.constant 0 : index
    %83 = vector.load %arg13[%c0_40, %c0_41] : memref<32x64xf32, #tpu.memory_space<vmem>>, vector<16x32xf32>
    tpu.vector_store %arg13[%c0_40, %c0_41], %82 {strides = array<i32>} : memref<32x64xf32, #tpu.memory_space<vmem>>, vector<16x32xf32>,
    %c16_42 = arith.constant 16 : index
    %c32_43 = arith.constant 32 : index
    %84 = vector.load %arg13[%c16_42, %c32_43] : memref<32x64xf32, #tpu.memory_space<vmem>>, vector<16x32xf32>
    tpu.vector_store %arg13[%c16_42, %c32_43], %82 {strides = array<i32>} : memref<32x64xf32, #tpu.memory_space<vmem>>, vector<16x32xf32>,
    %c0_44 = arith.constant 0 : index
    %c0_45 = arith.constant 0 : index
    %85 = vector.load %arg13[%c0_44, %c0_45] : memref<32x64xf32, #tpu.memory_space<vmem>>, vector<32x64xf32>
    %c1 = arith.constant 1 : index
    %c0_46 = arith.constant 0 : index
    %c0_47 = arith.constant 0 : index
    %86 = vector.load %arg6[%c1, %c0_46, %c0_47] : memref<4x64x64xf32, #tpu.memory_space<vmem>>, vector<1x64x64xf32>
    %87 = vector.shape_cast %86 : vector<1x64x64xf32> to vector<64x64xf32>
    %c1_48 = arith.constant 1 : index
    %c0_49 = arith.constant 0 : index
    %c0_50 = arith.constant 0 : index
    %88 = vector.load %arg7[%c1_48, %c0_49, %c0_50] : memref<4x64x32xf32, #tpu.memory_space<vmem>>, vector<1x64x32xf32>
    %89 = vector.shape_cast %88 : vector<1x64x32xf32> to vector<64x32xf32>
    %cst_51 = arith.constant dense<0.000000e+00> : vector<32x64xf32>
    %90 = tpu.matmul %85, %87, %cst_51 {dimension_numbers = #tpu.dot_dimension_numbers<[1], [0], [0], [1], [0, 0, 1, 1], [], []>} : vector<32x64xf32>, vector<64x64xf32>, vector<32x64xf32> -> vector<32x64xf32>
    %cst_52 = arith.constant dense<0.000000e+00> : vector<32x40xf32>
    %91 = tpu.matmul %90, %3, %cst_52 {dimension_numbers = #tpu.dot_dimension_numbers<[1], [1], [0], [0], [0, 0, 1, 0], [], []>} : vector<32x64xf32>, vector<40x64xf32>, vector<32x40xf32> -> vector<32x40xf32>
    %92 = arith.addf %91, %2 : vector<32x40xf32>
    %cst_53 = arith.constant dense<0xFF800000> : vector<32xf32>
    %93 = vector.multi_reduction <maximumf>, %92, %cst_53 [1] : vector<32x40xf32> to vector<32xf32>
    %94 = vector.shape_cast %93 : vector<32xf32> to vector<32x1xf32>
    %95 = vector.broadcast %94 : vector<32x1xf32> to vector<32x40xf32>
    %96 = arith.subf %92, %95 : vector<32x40xf32>
    %97 = math.exp %96 : vector<32x40xf32>
    %cst_54 = arith.constant dense<0.000000e+00> : vector<32xf32>
    %98 = vector.multi_reduction <add>, %97, %cst_54 [1] : vector<32x40xf32> to vector<32xf32>
    %99 = vector.shape_cast %98 : vector<32xf32> to vector<32x1xf32>
    %100 = tpu.reciprocal %99 {approx = true} : vector<32x1xf32> -> vector<32x1xf32>
    %101 = vector.broadcast %100 : vector<32x1xf32> to vector<32x40xf32>
    %102 = arith.mulf %97, %101 : vector<32x40xf32>
    %cst_55 = arith.constant dense<0.000000e+00> : vector<40x32xf32>
    %103 = tpu.matmul %3, %89, %cst_55 {dimension_numbers = #tpu.dot_dimension_numbers<[1], [0], [0], [1], [0, 0, 1, 1], [], []>} : vector<40x64xf32>, vector<64x32xf32>, vector<40x32xf32> -> vector<40x32xf32>
    %cst_56 = arith.constant dense<0.000000e+00> : vector<32x32xf32>
    %104 = tpu.matmul %102, %103, %cst_56 {dimension_numbers = #tpu.dot_dimension_numbers<[1], [0], [0], [1], [0, 0, 1, 1], [], []>} : vector<32x40xf32>, vector<40x32xf32>, vector<32x32xf32> -> vector<32x32xf32>
    %105 = vector.extract_strided_slice %104 {offsets = [0, 0], sizes = [16, 32], strides = [1, 1]} : vector<32x32xf32> to vector<16x32xf32>
    %106 = vector.extract_strided_slice %104 {offsets = [16, 0], sizes = [16, 32], strides = [1, 1]} : vector<32x32xf32> to vector<16x32xf32>
    %107 = arith.addf %105, %106 : vector<16x32xf32>
    %108 = arith.addf %107, %82 : vector<16x32xf32>
    %109 = vector.extract_strided_slice %32 {offsets = [2, 0], sizes = [1, 32], strides = [1, 1]} : vector<8x32xf32> to vector<1x32xf32>
    %110 = vector.extract_strided_slice %32 {offsets = [3, 0], sizes = [1, 32], strides = [1, 1]} : vector<8x32xf32> to vector<1x32xf32>
    %cst_57 = arith.constant dense<0.000000e+00> : vector<16xf32>
    %111 = vector.multi_reduction <add>, %108, %cst_57 [1] : vector<16x32xf32> to vector<16xf32>
    %112 = vector.shape_cast %111 : vector<16xf32> to vector<16x1xf32>
    %cst_58 = arith.constant 3.200000e+01 : f32
    %113 = vector.broadcast %cst_58 : f32 to vector<16x1xf32>
    %114 = arith.divf %112, %113 : vector<16x1xf32>
    %115 = vector.broadcast %114 : vector<16x1xf32> to vector<16x32xf32>
    %116 = arith.subf %108, %115 : vector<16x32xf32>
    %117 = arith.mulf %116, %116 : vector<16x32xf32>
    %cst_59 = arith.constant dense<0.000000e+00> : vector<16xf32>
    %118 = vector.multi_reduction <add>, %117, %cst_59 [1] : vector<16x32xf32> to vector<16xf32>
    %119 = vector.shape_cast %118 : vector<16xf32> to vector<16x1xf32>
    %cst_60 = arith.constant 3.200000e+01 : f32
    %120 = vector.broadcast %cst_60 : f32 to vector<16x1xf32>
    %121 = arith.divf %119, %120 : vector<16x1xf32>
    %122 = vector.broadcast %114 : vector<16x1xf32> to vector<16x32xf32>
    %123 = arith.subf %108, %122 : vector<16x32xf32>
    %cst_61 = arith.constant 9.99999997E-7 : f32
    %124 = vector.broadcast %cst_61 : f32 to vector<16x1xf32>
    %125 = arith.addf %121, %124 : vector<16x1xf32>
    %126 = math.rsqrt %125 : vector<16x1xf32>
    %127 = vector.broadcast %126 : vector<16x1xf32> to vector<16x32xf32>
    %128 = arith.mulf %123, %127 : vector<16x32xf32>
    %129 = vector.broadcast %109 : vector<1x32xf32> to vector<16x32xf32>
    %130 = arith.mulf %128, %129 : vector<16x32xf32>
    %131 = vector.broadcast %110 : vector<1x32xf32> to vector<16x32xf32>
    %132 = arith.addf %130, %131 : vector<16x32xf32>
    %c0_62 = arith.constant 0 : index
    %c0_63 = arith.constant 0 : index
    %c0_64 = arith.constant 0 : index
    %133 = vector.load %arg8[%c0_62, %c0_63, %c0_64] : memref<2x32x64xf32, #tpu.memory_space<vmem>>, vector<1x32x64xf32>
    %134 = vector.shape_cast %133 : vector<1x32x64xf32> to vector<32x64xf32>
    %cst_65 = arith.constant dense<0.000000e+00> : vector<16x64xf32>
    %135 = tpu.matmul %132, %134, %cst_65 {dimension_numbers = #tpu.dot_dimension_numbers<[1], [0], [0], [1], [0, 0, 1, 1], [], []>} : vector<16x32xf32>, vector<32x64xf32>, vector<16x64xf32> -> vector<16x64xf32>
    %c0_66 = arith.constant 0 : index
    %c0_67 = arith.constant 0 : index
    %c0_68 = arith.constant 0 : index
    %136 = vector.load %arg11[%c0_66, %c0_67, %c0_68] : memref<2x1x64xf32, #tpu.memory_space<vmem>>, vector<1x1x64xf32>
    %137 = vector.shape_cast %136 : vector<1x1x64xf32> to vector<1x64xf32>
    %138 = vector.broadcast %137 : vector<1x64xf32> to vector<16x64xf32>
    %139 = arith.addf %135, %138 : vector<16x64xf32>
    %cst_69 = arith.constant 0.000000e+00 : f32
    %140 = vector.broadcast %cst_69 : f32 to vector<16x64xf32>
    %141 = arith.maximumf %139, %140 : vector<16x64xf32>
    %c0_70 = arith.constant 0 : index
    %c0_71 = arith.constant 0 : index
    %c0_72 = arith.constant 0 : index
    %142 = vector.load %arg9[%c0_70, %c0_71, %c0_72] : memref<2x64x32xf32, #tpu.memory_space<vmem>>, vector<1x64x32xf32>
    %143 = vector.shape_cast %142 : vector<1x64x32xf32> to vector<64x32xf32>
    %cst_73 = arith.constant dense<0.000000e+00> : vector<16x32xf32>
    %144 = tpu.matmul %141, %143, %cst_73 {dimension_numbers = #tpu.dot_dimension_numbers<[1], [0], [0], [1], [0, 0, 1, 1], [], []>} : vector<16x64xf32>, vector<64x32xf32>, vector<16x32xf32> -> vector<16x32xf32>
    %145 = vector.extract_strided_slice %32 {offsets = [6, 0], sizes = [1, 32], strides = [1, 1]} : vector<8x32xf32> to vector<1x32xf32>
    %146 = vector.broadcast %145 : vector<1x32xf32> to vector<16x32xf32>
    %147 = arith.addf %144, %146 : vector<16x32xf32>
    %148 = arith.addf %147, %132 : vector<16x32xf32>
    %149 = vector.extract_strided_slice %32 {offsets = [4, 0], sizes = [1, 32], strides = [1, 1]} : vector<8x32xf32> to vector<1x32xf32>
    %150 = vector.extract_strided_slice %32 {offsets = [5, 0], sizes = [1, 32], strides = [1, 1]} : vector<8x32xf32> to vector<1x32xf32>
    %cst_74 = arith.constant dense<0.000000e+00> : vector<16xf32>
    %151 = vector.multi_reduction <add>, %148, %cst_74 [1] : vector<16x32xf32> to vector<16xf32>
    %152 = vector.shape_cast %151 : vector<16xf32> to vector<16x1xf32>
    %cst_75 = arith.constant 3.200000e+01 : f32
    %153 = vector.broadcast %cst_75 : f32 to vector<16x1xf32>
    %154 = arith.divf %152, %153 : vector<16x1xf32>
    %155 = vector.broadcast %154 : vector<16x1xf32> to vector<16x32xf32>
    %156 = arith.subf %148, %155 : vector<16x32xf32>
    %157 = arith.mulf %156, %156 : vector<16x32xf32>
    %cst_76 = arith.constant dense<0.000000e+00> : vector<16xf32>
    %158 = vector.multi_reduction <add>, %157, %cst_76 [1] : vector<16x32xf32> to vector<16xf32>
    %159 = vector.shape_cast %158 : vector<16xf32> to vector<16x1xf32>
    %cst_77 = arith.constant 3.200000e+01 : f32
    %160 = vector.broadcast %cst_77 : f32 to vector<16x1xf32>
    %161 = arith.divf %159, %160 : vector<16x1xf32>
    %162 = vector.broadcast %154 : vector<16x1xf32> to vector<16x32xf32>
    %163 = arith.subf %148, %162 : vector<16x32xf32>
    %cst_78 = arith.constant 9.99999997E-7 : f32
    %164 = vector.broadcast %cst_78 : f32 to vector<16x1xf32>
    %165 = arith.addf %161, %164 : vector<16x1xf32>
    %166 = math.rsqrt %165 : vector<16x1xf32>
    %167 = vector.broadcast %166 : vector<16x1xf32> to vector<16x32xf32>
    %168 = arith.mulf %163, %167 : vector<16x32xf32>
    %169 = vector.broadcast %149 : vector<1x32xf32> to vector<16x32xf32>
    %170 = arith.mulf %168, %169 : vector<16x32xf32>
    %171 = vector.broadcast %150 : vector<1x32xf32> to vector<16x32xf32>
    %172 = arith.addf %170, %171 : vector<16x32xf32>
    %c1_79 = arith.constant 1 : index
    %c0_80 = arith.constant 0 : index
    %c0_81 = arith.constant 0 : index
    %173 = vector.load %arg10[%c1_79, %c0_80, %c0_81] : memref<2x8x32xf32, #tpu.memory_space<vmem>>, vector<1x8x32xf32>
    %174 = vector.shape_cast %173 : vector<1x8x32xf32> to vector<8x32xf32>
    %c0_82 = arith.constant 0 : index
    %c0_83 = arith.constant 0 : index
    %175 = vector.load %arg13[%c0_82, %c0_83] : memref<32x64xf32, #tpu.memory_space<vmem>>, vector<16x32xf32>
    tpu.vector_store %arg13[%c0_82, %c0_83], %172 {strides = array<i32>} : memref<32x64xf32, #tpu.memory_space<vmem>>, vector<16x32xf32>,
    %c16_84 = arith.constant 16 : index
    %c32_85 = arith.constant 32 : index
    %176 = vector.load %arg13[%c16_84, %c32_85] : memref<32x64xf32, #tpu.memory_space<vmem>>, vector<16x32xf32>
    tpu.vector_store %arg13[%c16_84, %c32_85], %172 {strides = array<i32>} : memref<32x64xf32, #tpu.memory_space<vmem>>, vector<16x32xf32>,
    %c0_86 = arith.constant 0 : index
    %c0_87 = arith.constant 0 : index
    %177 = vector.load %arg13[%c0_86, %c0_87] : memref<32x64xf32, #tpu.memory_space<vmem>>, vector<32x64xf32>
    %c2 = arith.constant 2 : index
    %c0_88 = arith.constant 0 : index
    %c0_89 = arith.constant 0 : index
    %178 = vector.load %arg6[%c2, %c0_88, %c0_89] : memref<4x64x64xf32, #tpu.memory_space<vmem>>, vector<1x64x64xf32>
    %179 = vector.shape_cast %178 : vector<1x64x64xf32> to vector<64x64xf32>
    %c2_90 = arith.constant 2 : index
    %c0_91 = arith.constant 0 : index
    %c0_92 = arith.constant 0 : index
    %180 = vector.load %arg7[%c2_90, %c0_91, %c0_92] : memref<4x64x32xf32, #tpu.memory_space<vmem>>, vector<1x64x32xf32>
    %181 = vector.shape_cast %180 : vector<1x64x32xf32> to vector<64x32xf32>
    %cst_93 = arith.constant dense<0.000000e+00> : vector<32x64xf32>
    %182 = tpu.matmul %177, %179, %cst_93 {dimension_numbers = #tpu.dot_dimension_numbers<[1], [0], [0], [1], [0, 0, 1, 1], [], []>} : vector<32x64xf32>, vector<64x64xf32>, vector<32x64xf32> -> vector<32x64xf32>
    %cst_94 = arith.constant dense<0.000000e+00> : vector<32x32xf32>
    %183 = tpu.matmul %182, %177, %cst_94 {dimension_numbers = #tpu.dot_dimension_numbers<[1], [1], [0], [0], [0, 0, 1, 0], [], []>} : vector<32x64xf32>, vector<32x64xf32>, vector<32x32xf32> -> vector<32x32xf32>
    %184 = arith.addf %183, %1 : vector<32x32xf32>
    %cst_95 = arith.constant dense<0xFF800000> : vector<32xf32>
    %185 = vector.multi_reduction <maximumf>, %184, %cst_95 [1] : vector<32x32xf32> to vector<32xf32>
    %186 = vector.shape_cast %185 : vector<32xf32> to vector<32x1xf32>
    %187 = vector.broadcast %186 : vector<32x1xf32> to vector<32x32xf32>
    %188 = arith.subf %184, %187 : vector<32x32xf32>
    %189 = math.exp %188 : vector<32x32xf32>
    %cst_96 = arith.constant dense<0.000000e+00> : vector<32xf32>
    %190 = vector.multi_reduction <add>, %189, %cst_96 [1] : vector<32x32xf32> to vector<32xf32>
    %191 = vector.shape_cast %190 : vector<32xf32> to vector<32x1xf32>
    %192 = tpu.reciprocal %191 {approx = true} : vector<32x1xf32> -> vector<32x1xf32>
    %193 = vector.broadcast %192 : vector<32x1xf32> to vector<32x32xf32>
    %194 = arith.mulf %189, %193 : vector<32x32xf32>
    %cst_97 = arith.constant dense<0.000000e+00> : vector<32x32xf32>
    %195 = tpu.matmul %177, %181, %cst_97 {dimension_numbers = #tpu.dot_dimension_numbers<[1], [0], [0], [1], [0, 0, 1, 1], [], []>} : vector<32x64xf32>, vector<64x32xf32>, vector<32x32xf32> -> vector<32x32xf32>
    %cst_98 = arith.constant dense<0.000000e+00> : vector<32x32xf32>
    %196 = tpu.matmul %194, %195, %cst_98 {dimension_numbers = #tpu.dot_dimension_numbers<[1], [0], [0], [1], [0, 0, 1, 1], [], []>} : vector<32x32xf32>, vector<32x32xf32>, vector<32x32xf32> -> vector<32x32xf32>
    %197 = vector.extract_strided_slice %196 {offsets = [0, 0], sizes = [16, 32], strides = [1, 1]} : vector<32x32xf32> to vector<16x32xf32>
    %198 = vector.extract_strided_slice %196 {offsets = [16, 0], sizes = [16, 32], strides = [1, 1]} : vector<32x32xf32> to vector<16x32xf32>
    %199 = arith.addf %197, %198 : vector<16x32xf32>
    %200 = arith.addf %199, %172 : vector<16x32xf32>
    %201 = vector.extract_strided_slice %174 {offsets = [0, 0], sizes = [1, 32], strides = [1, 1]} : vector<8x32xf32> to vector<1x32xf32>
    %202 = vector.extract_strided_slice %174 {offsets = [1, 0], sizes = [1, 32], strides = [1, 1]} : vector<8x32xf32> to vector<1x32xf32>
    %cst_99 = arith.constant dense<0.000000e+00> : vector<16xf32>
    %203 = vector.multi_reduction <add>, %200, %cst_99 [1] : vector<16x32xf32> to vector<16xf32>
    %204 = vector.shape_cast %203 : vector<16xf32> to vector<16x1xf32>
    %cst_100 = arith.constant 3.200000e+01 : f32
    %205 = vector.broadcast %cst_100 : f32 to vector<16x1xf32>
    %206 = arith.divf %204, %205 : vector<16x1xf32>
    %207 = vector.broadcast %206 : vector<16x1xf32> to vector<16x32xf32>
    %208 = arith.subf %200, %207 : vector<16x32xf32>
    %209 = arith.mulf %208, %208 : vector<16x32xf32>
    %cst_101 = arith.constant dense<0.000000e+00> : vector<16xf32>
    %210 = vector.multi_reduction <add>, %209, %cst_101 [1] : vector<16x32xf32> to vector<16xf32>
    %211 = vector.shape_cast %210 : vector<16xf32> to vector<16x1xf32>
    %cst_102 = arith.constant 3.200000e+01 : f32
    %212 = vector.broadcast %cst_102 : f32 to vector<16x1xf32>
    %213 = arith.divf %211, %212 : vector<16x1xf32>
    %214 = vector.broadcast %206 : vector<16x1xf32> to vector<16x32xf32>
    %215 = arith.subf %200, %214 : vector<16x32xf32>
    %cst_103 = arith.constant 9.99999997E-7 : f32
    %216 = vector.broadcast %cst_103 : f32 to vector<16x1xf32>
    %217 = arith.addf %213, %216 : vector<16x1xf32>
    %218 = math.rsqrt %217 : vector<16x1xf32>
    %219 = vector.broadcast %218 : vector<16x1xf32> to vector<16x32xf32>
    %220 = arith.mulf %215, %219 : vector<16x32xf32>
    %221 = vector.broadcast %201 : vector<1x32xf32> to vector<16x32xf32>
    %222 = arith.mulf %220, %221 : vector<16x32xf32>
    %223 = vector.broadcast %202 : vector<1x32xf32> to vector<16x32xf32>
    %224 = arith.addf %222, %223 : vector<16x32xf32>
    %c0_104 = arith.constant 0 : index
    %c0_105 = arith.constant 0 : index
    %225 = vector.load %arg13[%c0_104, %c0_105] : memref<32x64xf32, #tpu.memory_space<vmem>>, vector<16x32xf32>
    tpu.vector_store %arg13[%c0_104, %c0_105], %224 {strides = array<i32>} : memref<32x64xf32, #tpu.memory_space<vmem>>, vector<16x32xf32>,
    %c16_106 = arith.constant 16 : index
    %c32_107 = arith.constant 32 : index
    %226 = vector.load %arg13[%c16_106, %c32_107] : memref<32x64xf32, #tpu.memory_space<vmem>>, vector<16x32xf32>
    tpu.vector_store %arg13[%c16_106, %c32_107], %224 {strides = array<i32>} : memref<32x64xf32, #tpu.memory_space<vmem>>, vector<16x32xf32>,
    %c0_108 = arith.constant 0 : index
    %c0_109 = arith.constant 0 : index
    %227 = vector.load %arg13[%c0_108, %c0_109] : memref<32x64xf32, #tpu.memory_space<vmem>>, vector<32x64xf32>
    %c3 = arith.constant 3 : index
    %c0_110 = arith.constant 0 : index
    %c0_111 = arith.constant 0 : index
    %228 = vector.load %arg6[%c3, %c0_110, %c0_111] : memref<4x64x64xf32, #tpu.memory_space<vmem>>, vector<1x64x64xf32>
    %229 = vector.shape_cast %228 : vector<1x64x64xf32> to vector<64x64xf32>
    %c3_112 = arith.constant 3 : index
    %c0_113 = arith.constant 0 : index
    %c0_114 = arith.constant 0 : index
    %230 = vector.load %arg7[%c3_112, %c0_113, %c0_114] : memref<4x64x32xf32, #tpu.memory_space<vmem>>, vector<1x64x32xf32>
    %231 = vector.shape_cast %230 : vector<1x64x32xf32> to vector<64x32xf32>
    %cst_115 = arith.constant dense<0.000000e+00> : vector<32x64xf32>
    %232 = tpu.matmul %227, %229, %cst_115 {dimension_numbers = #tpu.dot_dimension_numbers<[1], [0], [0], [1], [0, 0, 1, 1], [], []>} : vector<32x64xf32>, vector<64x64xf32>, vector<32x64xf32> -> vector<32x64xf32>
    %cst_116 = arith.constant dense<0.000000e+00> : vector<32x40xf32>
    %233 = tpu.matmul %232, %3, %cst_116 {dimension_numbers = #tpu.dot_dimension_numbers<[1], [1], [0], [0], [0, 0, 1, 0], [], []>} : vector<32x64xf32>, vector<40x64xf32>, vector<32x40xf32> -> vector<32x40xf32>
    %234 = arith.addf %233, %2 : vector<32x40xf32>
    %cst_117 = arith.constant dense<0xFF800000> : vector<32xf32>
    %235 = vector.multi_reduction <maximumf>, %234, %cst_117 [1] : vector<32x40xf32> to vector<32xf32>
    %236 = vector.shape_cast %235 : vector<32xf32> to vector<32x1xf32>
    %237 = vector.broadcast %236 : vector<32x1xf32> to vector<32x40xf32>
    %238 = arith.subf %234, %237 : vector<32x40xf32>
    %239 = math.exp %238 : vector<32x40xf32>
    %cst_118 = arith.constant dense<0.000000e+00> : vector<32xf32>
    %240 = vector.multi_reduction <add>, %239, %cst_118 [1] : vector<32x40xf32> to vector<32xf32>
    %241 = vector.shape_cast %240 : vector<32xf32> to vector<32x1xf32>
    %242 = tpu.reciprocal %241 {approx = true} : vector<32x1xf32> -> vector<32x1xf32>
    %243 = vector.broadcast %242 : vector<32x1xf32> to vector<32x40xf32>
    %244 = arith.mulf %239, %243 : vector<32x40xf32>
    %cst_119 = arith.constant dense<0.000000e+00> : vector<40x32xf32>
    %245 = tpu.matmul %3, %231, %cst_119 {dimension_numbers = #tpu.dot_dimension_numbers<[1], [0], [0], [1], [0, 0, 1, 1], [], []>} : vector<40x64xf32>, vector<64x32xf32>, vector<40x32xf32> -> vector<40x32xf32>
    %cst_120 = arith.constant dense<0.000000e+00> : vector<32x32xf32>
    %246 = tpu.matmul %244, %245, %cst_120 {dimension_numbers = #tpu.dot_dimension_numbers<[1], [0], [0], [1], [0, 0, 1, 1], [], []>} : vector<32x40xf32>, vector<40x32xf32>, vector<32x32xf32> -> vector<32x32xf32>
    %247 = vector.extract_strided_slice %246 {offsets = [0, 0], sizes = [16, 32], strides = [1, 1]} : vector<32x32xf32> to vector<16x32xf32>
    %248 = vector.extract_strided_slice %246 {offsets = [16, 0], sizes = [16, 32], strides = [1, 1]} : vector<32x32xf32> to vector<16x32xf32>
    %249 = arith.addf %247, %248 : vector<16x32xf32>
    %250 = arith.addf %249, %224 : vector<16x32xf32>
    %251 = vector.extract_strided_slice %174 {offsets = [2, 0], sizes = [1, 32], strides = [1, 1]} : vector<8x32xf32> to vector<1x32xf32>
    %252 = vector.extract_strided_slice %174 {offsets = [3, 0], sizes = [1, 32], strides = [1, 1]} : vector<8x32xf32> to vector<1x32xf32>
    %cst_121 = arith.constant dense<0.000000e+00> : vector<16xf32>
    %253 = vector.multi_reduction <add>, %250, %cst_121 [1] : vector<16x32xf32> to vector<16xf32>
    %254 = vector.shape_cast %253 : vector<16xf32> to vector<16x1xf32>
    %cst_122 = arith.constant 3.200000e+01 : f32
    %255 = vector.broadcast %cst_122 : f32 to vector<16x1xf32>
    %256 = arith.divf %254, %255 : vector<16x1xf32>
    %257 = vector.broadcast %256 : vector<16x1xf32> to vector<16x32xf32>
    %258 = arith.subf %250, %257 : vector<16x32xf32>
    %259 = arith.mulf %258, %258 : vector<16x32xf32>
    %cst_123 = arith.constant dense<0.000000e+00> : vector<16xf32>
    %260 = vector.multi_reduction <add>, %259, %cst_123 [1] : vector<16x32xf32> to vector<16xf32>
    %261 = vector.shape_cast %260 : vector<16xf32> to vector<16x1xf32>
    %cst_124 = arith.constant 3.200000e+01 : f32
    %262 = vector.broadcast %cst_124 : f32 to vector<16x1xf32>
    %263 = arith.divf %261, %262 : vector<16x1xf32>
    %264 = vector.broadcast %256 : vector<16x1xf32> to vector<16x32xf32>
    %265 = arith.subf %250, %264 : vector<16x32xf32>
    %cst_125 = arith.constant 9.99999997E-7 : f32
    %266 = vector.broadcast %cst_125 : f32 to vector<16x1xf32>
    %267 = arith.addf %263, %266 : vector<16x1xf32>
    %268 = math.rsqrt %267 : vector<16x1xf32>
    %269 = vector.broadcast %268 : vector<16x1xf32> to vector<16x32xf32>
    %270 = arith.mulf %265, %269 : vector<16x32xf32>
    %271 = vector.broadcast %251 : vector<1x32xf32> to vector<16x32xf32>
    %272 = arith.mulf %270, %271 : vector<16x32xf32>
    %273 = vector.broadcast %252 : vector<1x32xf32> to vector<16x32xf32>
    %274 = arith.addf %272, %273 : vector<16x32xf32>
    %c1_126 = arith.constant 1 : index
    %c0_127 = arith.constant 0 : index
    %c0_128 = arith.constant 0 : index
    %275 = vector.load %arg8[%c1_126, %c0_127, %c0_128] : memref<2x32x64xf32, #tpu.memory_space<vmem>>, vector<1x32x64xf32>
    %276 = vector.shape_cast %275 : vector<1x32x64xf32> to vector<32x64xf32>
    %cst_129 = arith.constant dense<0.000000e+00> : vector<16x64xf32>
    %277 = tpu.matmul %274, %276, %cst_129 {dimension_numbers = #tpu.dot_dimension_numbers<[1], [0], [0], [1], [0, 0, 1, 1], [], []>} : vector<16x32xf32>, vector<32x64xf32>, vector<16x64xf32> -> vector<16x64xf32>
    %c1_130 = arith.constant 1 : index
    %c0_131 = arith.constant 0 : index
    %c0_132 = arith.constant 0 : index
    %278 = vector.load %arg11[%c1_130, %c0_131, %c0_132] : memref<2x1x64xf32, #tpu.memory_space<vmem>>, vector<1x1x64xf32>
    %279 = vector.shape_cast %278 : vector<1x1x64xf32> to vector<1x64xf32>
    %280 = vector.broadcast %279 : vector<1x64xf32> to vector<16x64xf32>
    %281 = arith.addf %277, %280 : vector<16x64xf32>
    %cst_133 = arith.constant 0.000000e+00 : f32
    %282 = vector.broadcast %cst_133 : f32 to vector<16x64xf32>
    %283 = arith.maximumf %281, %282 : vector<16x64xf32>
    %c1_134 = arith.constant 1 : index
    %c0_135 = arith.constant 0 : index
    %c0_136 = arith.constant 0 : index
    %284 = vector.load %arg9[%c1_134, %c0_135, %c0_136] : memref<2x64x32xf32, #tpu.memory_space<vmem>>, vector<1x64x32xf32>
    %285 = vector.shape_cast %284 : vector<1x64x32xf32> to vector<64x32xf32>
    %cst_137 = arith.constant dense<0.000000e+00> : vector<16x32xf32>
    %286 = tpu.matmul %283, %285, %cst_137 {dimension_numbers = #tpu.dot_dimension_numbers<[1], [0], [0], [1], [0, 0, 1, 1], [], []>} : vector<16x64xf32>, vector<64x32xf32>, vector<16x32xf32> -> vector<16x32xf32>
    %287 = vector.extract_strided_slice %174 {offsets = [6, 0], sizes = [1, 32], strides = [1, 1]} : vector<8x32xf32> to vector<1x32xf32>
    %288 = vector.broadcast %287 : vector<1x32xf32> to vector<16x32xf32>
    %289 = arith.addf %286, %288 : vector<16x32xf32>
    %290 = arith.addf %289, %274 : vector<16x32xf32>
    %291 = vector.extract_strided_slice %174 {offsets = [4, 0], sizes = [1, 32], strides = [1, 1]} : vector<8x32xf32> to vector<1x32xf32>
    %292 = vector.extract_strided_slice %174 {offsets = [5, 0], sizes = [1, 32], strides = [1, 1]} : vector<8x32xf32> to vector<1x32xf32>
    %cst_138 = arith.constant dense<0.000000e+00> : vector<16xf32>
    %293 = vector.multi_reduction <add>, %290, %cst_138 [1] : vector<16x32xf32> to vector<16xf32>
    %294 = vector.shape_cast %293 : vector<16xf32> to vector<16x1xf32>
    %cst_139 = arith.constant 3.200000e+01 : f32
    %295 = vector.broadcast %cst_139 : f32 to vector<16x1xf32>
    %296 = arith.divf %294, %295 : vector<16x1xf32>
    %297 = vector.broadcast %296 : vector<16x1xf32> to vector<16x32xf32>
    %298 = arith.subf %290, %297 : vector<16x32xf32>
    %299 = arith.mulf %298, %298 : vector<16x32xf32>
    %cst_140 = arith.constant dense<0.000000e+00> : vector<16xf32>
    %300 = vector.multi_reduction <add>, %299, %cst_140 [1] : vector<16x32xf32> to vector<16xf32>
    %301 = vector.shape_cast %300 : vector<16xf32> to vector<16x1xf32>
    %cst_141 = arith.constant 3.200000e+01 : f32
    %302 = vector.broadcast %cst_141 : f32 to vector<16x1xf32>
    %303 = arith.divf %301, %302 : vector<16x1xf32>
    %304 = vector.broadcast %296 : vector<16x1xf32> to vector<16x32xf32>
    %305 = arith.subf %290, %304 : vector<16x32xf32>
    %cst_142 = arith.constant 9.99999997E-7 : f32
    %306 = vector.broadcast %cst_142 : f32 to vector<16x1xf32>
    %307 = arith.addf %303, %306 : vector<16x1xf32>
    %308 = math.rsqrt %307 : vector<16x1xf32>
    %309 = vector.broadcast %308 : vector<16x1xf32> to vector<16x32xf32>
    %310 = arith.mulf %305, %309 : vector<16x32xf32>
    %311 = vector.broadcast %291 : vector<1x32xf32> to vector<16x32xf32>
    %312 = arith.mulf %310, %311 : vector<16x32xf32>
    %313 = vector.broadcast %292 : vector<1x32xf32> to vector<16x32xf32>
    %314 = arith.addf %312, %313 : vector<16x32xf32>
    %c0_143 = arith.constant 0 : index
    %c0_144 = arith.constant 0 : index
    %315 = vector.load %arg12[%c0_143, %c0_144] : memref<16x32xf32, #tpu.memory_space<vmem>>, vector<16x32xf32>
    tpu.vector_store %arg12[%c0_143, %c0_144], %314 {strides = array<i32>} : memref<16x32xf32, #tpu.memory_space<vmem>>, vector<16x32xf32>,
    return
  }
  func.func @transform_0(%arg0: i32) -> (i32, i32) {
    %c0_i32 = arith.constant 0 : i32
    %c0_i32_0 = arith.constant 0 : i32
    %c0_i32_1 = arith.constant 0 : i32
    return %c0_i32, %c0_i32_0 : i32, i32
  }
  func.func @transform_1(%arg0: i32) -> (i32, i32) {
    %c0_i32 = arith.constant 0 : i32
    %c0_i32_0 = arith.constant 0 : i32
    %c0_i32_1 = arith.constant 0 : i32
    return %c0_i32, %c0_i32_0 : i32, i32
  }
  func.func @transform_2(%arg0: i32) -> (i32, i32) {
    %c0_i32 = arith.constant 0 : i32
    %c0_i32_0 = arith.constant 0 : i32
    %c0_i32_1 = arith.constant 0 : i32
    return %c0_i32, %c0_i32_0 : i32, i32
  }
  func.func @transform_3(%arg0: i32) -> (i32, i32) {
    %c0_i32 = arith.constant 0 : i32
    %c0_i32_0 = arith.constant 0 : i32
    %c0_i32_1 = arith.constant 0 : i32
    return %c0_i32, %c0_i32_0 : i32, i32
  }
  func.func @transform_4(%arg0: i32) -> (i32, i32) {
    %c0_i32 = arith.constant 0 : i32
    %c0_i32_0 = arith.constant 0 : i32
    %c0_i32_1 = arith.constant 0 : i32
    return %c0_i32, %c0_i32_0 : i32, i32
  }
  func.func @transform_5(%arg0: i32) -> (i32, i32, i32) {
    %c0_i32 = arith.constant 0 : i32
    %c0_i32_0 = arith.constant 0 : i32
    %c0_i32_1 = arith.constant 0 : i32
    %c0_i32_2 = arith.constant 0 : i32
    return %c0_i32, %c0_i32_0, %c0_i32_1 : i32, i32, i32
  }
  func.func @transform_6(%arg0: i32) -> (i32, i32, i32) {
    %c0_i32 = arith.constant 0 : i32
    %c0_i32_0 = arith.constant 0 : i32
    %c0_i32_1 = arith.constant 0 : i32
    %c0_i32_2 = arith.constant 0 : i32
    return %c0_i32, %c0_i32_0, %c0_i32_1 : i32, i32, i32
  }
  func.func @transform_7(%arg0: i32) -> (i32, i32, i32) {
    %c0_i32 = arith.constant 0 : i32
    %c0_i32_0 = arith.constant 0 : i32
    %c0_i32_1 = arith.constant 0 : i32
    %c0_i32_2 = arith.constant 0 : i32
    return %c0_i32, %c0_i32_0, %c0_i32_1 : i32, i32, i32
  }
  func.func @transform_8(%arg0: i32) -> (i32, i32, i32) {
    %c0_i32 = arith.constant 0 : i32
    %c0_i32_0 = arith.constant 0 : i32
    %c0_i32_1 = arith.constant 0 : i32
    %c0_i32_2 = arith.constant 0 : i32
    return %c0_i32, %c0_i32_0, %c0_i32_1 : i32, i32, i32
  }
  func.func @transform_9(%arg0: i32) -> (i32, i32, i32) {
    %c0_i32 = arith.constant 0 : i32
    %c0_i32_0 = arith.constant 0 : i32
    %c0_i32_1 = arith.constant 0 : i32
    %c0_i32_2 = arith.constant 0 : i32
    return %c0_i32, %c0_i32_0, %c0_i32_1 : i32, i32, i32
  }
  func.func @transform_10(%arg0: i32) -> (i32, i32, i32) {
    %c0_i32 = arith.constant 0 : i32
    %c0_i32_0 = arith.constant 0 : i32
    %c0_i32_1 = arith.constant 0 : i32
    %c0_i32_2 = arith.constant 0 : i32
    return %c0_i32, %c0_i32_0, %c0_i32_1 : i32, i32, i32
  }
  func.func @transform_11(%arg0: i32) -> (i32, i32) {
    %c0_i32 = arith.constant 0 : i32
    %c0_i32_0 = arith.constant 0 : i32
    %c0_i32_1 = arith.constant 0 : i32
    return %c0_i32, %c0_i32_0 : i32, i32
  }
}

</mosaic_0001>

<llo_original>
// kernel: decoder_forward.1
$region0: #{decoder_forward.1}
  #allocation0 [shape = 'u32[]', space=smem, size = 0x4, offset = 0x4, fixed_abs, tag = 'smem constant byte address 0x4 - core index']
  #allocation1 [shape = 'u32[72,128]{1,0:T(1,128)}', space=vmem, size = 0x9000, scoped, tag = 'internal scratch']
  #allocation2 [shape = 'f32[32,64]{1,0:T(8,128)}', space=vmem, size = 0x4000, scoped, tag = 'scratch operand']
  %s0 = inlined_call_operand.vmem [shape: f32[16,32], index: 0, kind: input, shape index: {}]
  %s1 = inlined_call_operand.vmem [shape: f32[40,64], index: 1, kind: input, shape index: {}]
  %s2 = inlined_call_operand.vmem [shape: f32[32,32], index: 2, kind: input, shape index: {}]
  %s3 = inlined_call_operand.vmem [shape: f32[32,40], index: 3, kind: input, shape index: {}]
  %s4 = inlined_call_operand.vmem [shape: f32[2,32], index: 4, kind: input, shape index: {}]
  %s5 = inlined_call_operand.vmem [shape: f32[4,64,64], index: 5, kind: input, shape index: {}]
  %s6 = inlined_call_operand.vmem [shape: f32[4,64,32], index: 6, kind: input, shape index: {}]
  %s7 = inlined_call_operand.vmem [shape: f32[2,32,64], index: 7, kind: input, shape index: {}]
  %s8 = inlined_call_operand.vmem [shape: f32[2,64,32], index: 8, kind: input, shape index: {}]
  %s9 = inlined_call_operand.vmem [shape: f32[2,8,32], index: 9, kind: input, shape index: {}]
  %s10 = inlined_call_operand.vmem [shape: f32[2,1,64], index: 10, kind: input, shape index: {}]
  %s11 = inlined_call_operand.hbm [shape: f32[16,32], index: 11, kind: output, shape index: {}]
  %s12 = sld [smem:[#allocation0]]
  $region54: #{decoder_forward.1} parent=0
    _
  %s14 = ssub.s32 1, %s12
  %s15 = scalar_select 0, %s14, %s12
  $region1: #{decoder_forward.1} parent=0
    #allocation3 [shape = 'u8[8192]{0}', space=vmem, size = 0x2000, scoped, tag = 'output window, operand 0, single buffered']
    #allocation4 [shape = 's32[1]{0}', space=sflag, size = 0x4, scoped, tag = 'scoped memory for decoder_forward.1']
    %16 = vsyncpa [#allocation4], 0
    // Predicated region
    $region2: #{decoder_forward.1} parent=1 // pred_check
      _
    $region3: #{decoder_forward.1} parent=1 // pred_check_branch
      %18 = sbr.rel (0) target = $region5
    $region4: #{decoder_forward.1} parent=1 // pred_region
      _
    $region5: #{decoder_forward.1} parent=1 // pred_fallthru
      _
    // Predicated region
    $region6: #{decoder_forward.1} parent=1 // pred_check
      _
    $region7: #{decoder_forward.1} parent=1 // pred_check_branch
      %20 = sbr.rel (0) target = $region9
    $region8: #{decoder_forward.1} parent=1 // pred_region
      _
    $region9: #{decoder_forward.1} parent=1 // pred_fallthru
      _
    // Predicated region
    $region10: #{decoder_forward.1} parent=1 // pred_check
      _
    $region11: #{decoder_forward.1} parent=1 // pred_check_branch
      %22 = sbr.rel (0) target = $region13
    $region12: #{decoder_forward.1} parent=1 // pred_region
      _
    $region13: #{decoder_forward.1} parent=1 // pred_fallthru
      _
    // Predicated region
    $region14: #{decoder_forward.1} parent=1 // pred_check
      _
    $region15: #{decoder_forward.1} parent=1 // pred_check_branch
      %24 = sbr.rel (0) target = $region17
    $region16: #{decoder_forward.1} parent=1 // pred_region
      _
    $region17: #{decoder_forward.1} parent=1 // pred_fallthru
      _
    // Predicated region
    $region18: #{decoder_forward.1} parent=1 // pred_check
      _
    $region19: #{decoder_forward.1} parent=1 // pred_check_branch
      %26 = sbr.rel (0) target = $region21
    $region20: #{decoder_forward.1} parent=1 // pred_region
      _
    $region21: #{decoder_forward.1} parent=1 // pred_fallthru
      _
    // Predicated region
    $region22: #{decoder_forward.1} parent=1 // pred_check
      _
    $region23: #{decoder_forward.1} parent=1 // pred_check_branch
      %28 = sbr.rel (0) target = $region25
    $region24: #{decoder_forward.1} parent=1 // pred_region
      _
    $region25: #{decoder_forward.1} parent=1 // pred_fallthru
      _
    // Predicated region
    $region26: #{decoder_forward.1} parent=1 // pred_check
      _
    $region27: #{decoder_forward.1} parent=1 // pred_check_branch
      %30 = sbr.rel (0) target = $region29
    $region28: #{decoder_forward.1} parent=1 // pred_region
      _
    $region29: #{decoder_forward.1} parent=1 // pred_fallthru
      _
    // Predicated region
    $region30: #{decoder_forward.1} parent=1 // pred_check
      _
    $region31: #{decoder_forward.1} parent=1 // pred_check_branch
      %32 = sbr.rel (0) target = $region33
    $region32: #{decoder_forward.1} parent=1 // pred_region
      _
    $region33: #{decoder_forward.1} parent=1 // pred_fallthru
      _
    // Predicated region
    $region34: #{decoder_forward.1} parent=1 // pred_check
      _
    $region35: #{decoder_forward.1} parent=1 // pred_check_branch
      %34 = sbr.rel (0) target = $region37
    $region36: #{decoder_forward.1} parent=1 // pred_region
      _
    $region37: #{decoder_forward.1} parent=1 // pred_fallthru
      _
    // Predicated region
    $region38: #{decoder_forward.1} parent=1 // pred_check
      _
    $region39: #{decoder_forward.1} parent=1 // pred_check_branch
      %36 = sbr.rel (0) target = $region41
    $region40: #{decoder_forward.1} parent=1 // pred_region
      _
    $region41: #{decoder_forward.1} parent=1 // pred_fallthru
      _
    // Predicated region
    $region42: #{decoder_forward.1} parent=1 // pred_check
      _
    $region43: #{decoder_forward.1} parent=1 // pred_check_branch
      %38 = sbr.rel (0) target = $region45
    $region44: #{decoder_forward.1} parent=1 // pred_region
      _
    $region45: #{decoder_forward.1} parent=1 // pred_fallthru
      _
    %v39 = vld [vmem:[%s4] sm:$0x3]
    %v40 = vld [vmem:[%s2] sm:$0xff]
    %v41 = vld [vmem:[%s2 + $0x8] sm:$0xff]
    %v42 = vld [vmem:[%s2 + $0x10] sm:$0xff]
    %v43 = vld [vmem:[%s2 + $0x18] sm:$0xff]
    %v44 = vld [vmem:[%s3] sm:$0xff]
    %v45 = vld [vmem:[%s3 + $0x8] sm:$0xff]
    %v46 = vld [vmem:[%s3 + $0x10] sm:$0xff]
    %v47 = vld [vmem:[%s3 + $0x18] sm:$0xff]
    %v48 = vld [vmem:[%s1] sm:$0xff]
    %v49 = vld [vmem:[%s1 + $0x8] sm:$0xff]
    %v50 = vld [vmem:[%s1 + $0x10] sm:$0xff]
    %v51 = vld [vmem:[%s1 + $0x18] sm:$0xff]
    %v52 = vld [vmem:[%s1 + $0x20] sm:$0xff]
    %v53 = vld [vmem:[%s0] sm:$0xff]
    %v54 = vld [vmem:[%s0 + $0x8] sm:$0xff]
    %vm55 = vcmask 261120
    %v56 = vsel %vm55, %v53, 0.0
    %57 = vadd.xlane.f32.xlu0 %v56
    %v58 = vpop.xlane.xlu0 %57
    %v59 = vsel %vm55, %v54, 0.0
    %60 = vadd.xlane.f32.xlu0 %v59
    %v61 = vpop.xlane.xlu0 %60
    %v62 = vrcp.pop 32.0
    %v63 = vmul.f32 32.0, %v62
    %v64 = vsub.f32 1.0, %v63
    %v65 = vmul.f32 %v62, %v64
    %v66 = vadd.f32 %v62, %v65
    %vm67 = vweird.f32 %v62
    %v68 = vsel %vm67, %v62, %v66
    %v69 = vmul.f32 %v58, %v68
    %v70 = vmul.f32 %v61, %v68
    %v71 = vsub.f32 %v53, %v69
    %v72 = vsub.f32 %v54, %v70
    %v73 = vmul.f32 %v71, %v71
    %v74 = vmul.f32 %v72, %v72
    %v75 = vsel %vm55, %v73, 0.0
    %76 = vadd.xlane.f32.xlu0 %v75
    %v77 = vpop.xlane.xlu0 %76
    %v78 = vsel %vm55, %v74, 0.0
    %79 = vadd.xlane.f32.xlu0 %v78
    %v80 = vpop.xlane.xlu0 %79
    %v81 = vmul.f32 %v77, %v68
    %v82 = vmul.f32 %v80, %v68
    %v83 = vadd.f32 %v81, 1e-06
    %v84 = vadd.f32 %v82, 1e-06
    %v85 = vrsqrt.pop %v83
    %v86 = vmul.f32 %v85, %v83
    %v87 = vmul.f32 %v86, %v85
    %v88 = vmul.f32 0.5, %v87
    %v89 = vsub.f32 1.5, %v88
    %v90 = vmul.f32 %v85, %v89
    %vm91 = vweird.f32 %v83
    %vm92 = vweird.f32 %v85
    %vm93 = vmor %vm91, %vm92
    %v94 = vsel %vm93, %v85, %v90
    %v95 = vrsqrt.pop %v84
    %v96 = vmul.f32 %v95, %v84
    %v97 = vmul.f32 %v96, %v95
    %v98 = vmul.f32 0.5, %v97
    %v99 = vsub.f32 1.5, %v98
    %v100 = vmul.f32 %v95, %v99
    %vm101 = vweird.f32 %v84
    %vm102 = vweird.f32 %v95
    %vm103 = vmor %vm101, %vm102
    %v104 = vsel %vm103, %v95, %v100
    %v105 = vmul.f32 %v71, %v94
    %v106 = vmul.f32 %v72, %v104
    %v107 = vperm.slane %v39, 0
    %v108 = vmul.f32 %v105, %v107
    %v109 = vmul.f32 %v106, %v107
    %v110 = vperm.slane %v39, 1
    %v111 = vadd.f32 %v108, %v110
    %v112 = vadd.f32 %v109, %v110
    %vm113 = vcmask 523264
    %114 = vst.msk [vmem:[#allocation2] sm:$0xff] %vm113, 0.0
    %115 = vst.msk [vmem:[#allocation2 + $0x8] sm:$0xff] %vm113, 0.0
    %116 = vst.msk [vmem:[#allocation2 + $0x10] sm:$0xff] %vm113, 0.0
    %117 = vst.msk [vmem:[#allocation2 + $0x18] sm:$0xff] %vm113, 0.0
    %v118 = vld [vmem:[%s9] sm:$0xff]
    %119 = vst.msk [vmem:[#allocation2] sm:$0xff] %vm55, %v111
    %120 = vst.msk [vmem:[#allocation2 + $0x8] sm:$0xff] %vm55, %v112
    %123 = vrot.lane.b32.xlu0 %v111, 32
    %v124 = vpop.permute.xlu0 %123
    %125 = vrot.lane.b32.xlu0 %v112, 32
    %v126 = vpop.permute.xlu0 %125
    %vm129 = vcmask 523520
    %130 = vst.msk [vmem:[#allocation2 + $0x10] sm:$0xff] %vm129, %v124
    %131 = vst.msk [vmem:[#allocation2 + $0x18] sm:$0xff] %vm129, %v126
    %v132 = vld [vmem:[#allocation2] sm:$0xff]
    %v133 = vld [vmem:[#allocation2 + $0x8] sm:$0xff]
    %v134 = vld [vmem:[#allocation2 + $0x10] sm:$0xff]
    %v135 = vld [vmem:[#allocation2 + $0x18] sm:$0xff]
    %v136 = vld [vmem:[%s5] sm:$0xff]
    %v137 = vld [vmem:[%s5 + $0x8] sm:$0xff]
    %v138 = vld [vmem:[%s5 + $0x10] sm:$0xff]
    %v139 = vld [vmem:[%s5 + $0x18] sm:$0xff]
    %v140 = vld [vmem:[%s5 + $0x20] sm:$0xff]
    %v141 = vld [vmem:[%s5 + $0x28] sm:$0xff]
    %v142 = vld [vmem:[%s5 + $0x30] sm:$0xff]
    %v143 = vld [vmem:[%s5 + $0x38] sm:$0xff]
    %v144 = vld [vmem:[%s6] sm:$0xff]
    %v145 = vld [vmem:[%s6 + $0x8] sm:$0xff]
    %v146 = vld [vmem:[%s6 + $0x10] sm:$0xff]
    %v147 = vld [vmem:[%s6 + $0x18] sm:$0xff]
    %v148 = vld [vmem:[%s6 + $0x20] sm:$0xff]
    %v149 = vld [vmem:[%s6 + $0x28] sm:$0xff]
    %v150 = vld [vmem:[%s6 + $0x30] sm:$0xff]
    %v151 = vld [vmem:[%s6 + $0x38] sm:$0xff]
    %v153 = vsel %vm113, %v132, 0
    %v156 = vsel %vm113, %v133, 0
    %v159 = vsel %vm113, %v134, 0
    %v162 = vsel %vm113, %v135, 0
    %164 = vmatpush.msra.mxu0 0.0
    %165 = vmatpush.msra.mxu0 0.0
    %166 = vmatpush.msra.mxu0 0.0
    %167 = vmatpush.msra.mxu0 0.0
    %168 = vmatpush.msra.mxu0 0.0
    %169 = vmatpush.msra.mxu0 0.0
    %170 = vmatpush.msra.mxu0 0.0
    %171 = vmatpush.msra.mxu0 0.0
    %172 = vmatpush.msra.mxu0 %v143
    %173 = vmatpush.msra.mxu0 %v142
    %174 = vmatpush.msra.mxu0 %v141
    %175 = vmatpush.msra.mxu0 %v140
    %176 = vmatpush.msra.mxu0 %v139
    %177 = vmatpush.msra.mxu0 %v138
    %178 = vmatpush.msra.mxu0 %v137
    %179 = vmatpush.msra.mxu0 %v136
    %180 = vmatmul.f32.gmra.mxu0 %v153
    %v181 = vpop.f32.mrf.mxu0
    %v182 = vadd.f32 0.0, %v181
    %183 = vmatmul.f32.gmra.mxu0 %v156
    %v184 = vpop.f32.mrf.mxu0
    %v185 = vadd.f32 0.0, %v184
    %186 = vmatmul.f32.gmra.mxu0 %v159
    %v187 = vpop.f32.mrf.mxu0
    %v188 = vadd.f32 0.0, %v187
    %189 = vmatmul.f32.gmra.mxu0 %v162
    %v190 = vpop.f32.mrf.mxu0
    %v191 = vadd.f32 0.0, %v190
    %192 = vdwg.mxu0
    %v194 = vsel %vm113, %v182, 0
    %v197 = vsel %vm113, %v185, 0
    %v200 = vsel %vm113, %v188, 0
    %v203 = vsel %vm113, %v191, 0
    %205 = vmatpush.xpose.msra.mxu0 0.0
    %206 = vmatpush.xpose.msra.mxu0 0.0
    %207 = vmatpush.xpose.msra.mxu0 0.0
    %208 = vmatpush.xpose.msra.mxu0 0.0
    %209 = vmatpush.xpose.msra.mxu0 0.0
    %210 = vmatpush.xpose.msra.mxu0 0.0
    %211 = vmatpush.xpose.msra.mxu0 0.0
    %212 = vmatpush.xpose.msra.mxu0 0.0
    %213 = vmatpush.xpose.msra.mxu0 0.0
    %214 = vmatpush.xpose.msra.mxu0 0.0
    %215 = vmatpush.xpose.msra.mxu0 0.0
    %216 = vmatpush.xpose.msra.mxu0 0.0
    %217 = vmatpush.xpose.msra.mxu0 %v162
    %218 = vmatpush.xpose.msra.mxu0 %v159
    %219 = vmatpush.xpose.msra.mxu0 %v156
    %220 = vmatpush.xpose.msra.mxu0 %v153
    %221 = vmatmul.f32.gmra.mxu0 %v194
    %v222 = vpop.f32.mrf.mxu0
    %v223 = vadd.f32 %v40, %v222
    %224 = vmatmul.f32.gmra.mxu0 %v197
    %v225 = vpop.f32.mrf.mxu0
    %v226 = vadd.f32 %v41, %v225
    %227 = vmatmul.f32.gmra.mxu0 %v200
    %v228 = vpop.f32.mrf.mxu0
    %v229 = vadd.f32 %v42, %v228
    %230 = vmatmul.f32.gmra.mxu0 %v203
    %v231 = vpop.f32.mrf.mxu0
    %v232 = vadd.f32 %v43, %v231
    %233 = vdwg.mxu0
    %v234 = vsel %vm55, %v223, -inf
    %235 = vmax.xlane.f32.xlu0 %v234
    %v236 = vpop.xlane.xlu0 %235
    %v237 = vsel %vm55, %v226, -inf
    %238 = vmax.xlane.f32.xlu0 %v237
    %v239 = vpop.xlane.xlu0 %238
    %v240 = vsel %vm55, %v229, -inf
    %241 = vmax.xlane.f32.xlu0 %v240
    %v242 = vpop.xlane.xlu0 %241
    %v243 = vsel %vm55, %v232, -inf
    %244 = vmax.xlane.f32.xlu0 %v243
    %v245 = vpop.xlane.xlu0 %244
    %v246 = vsub.f32 %v223, %v236
    %v247 = vsub.f32 %v226, %v239
    %v248 = vsub.f32 %v229, %v242
    %v249 = vsub.f32 %v232, %v245
    %v250 = vmul.f32 %v246, 1.442695
    %v251 = vpow.pop %v250
    %v252 = vmul.f32 %v247, 1.442695
    %v253 = vpow.pop %v252
    %v254 = vmul.f32 %v248, 1.442695
    %v255 = vpow.pop %v254
    %v256 = vmul.f32 %v249, 1.442695
    %v257 = vpow.pop %v256
    %v258 = vsel %vm55, %v251, 0.0
    %259 = vadd.xlane.f32.xlu0 %v258
    %v260 = vpop.xlane.xlu0 %259
    %v261 = vsel %vm55, %v253, 0.0
    %262 = vadd.xlane.f32.xlu0 %v261
    %v263 = vpop.xlane.xlu0 %262
    %v264 = vsel %vm55, %v255, 0.0
    %265 = vadd.xlane.f32.xlu0 %v264
    %v266 = vpop.xlane.xlu0 %265
    %v267 = vsel %vm55, %v257, 0.0
    %268 = vadd.xlane.f32.xlu0 %v267
    %v269 = vpop.xlane.xlu0 %268
    %v270 = vrcp.pop %v260
    %v271 = vrcp.pop %v263
    %v272 = vrcp.pop %v266
    %v273 = vrcp.pop %v269
    %v274 = vmul.f32 %v251, %v270
    %v275 = vmul.f32 %v253, %v271
    %v276 = vmul.f32 %v255, %v272
    %v277 = vmul.f32 %v257, %v273
    %278 = vmatpush.msra.mxu0 0.0
    %279 = vmatpush.msra.mxu0 0.0
    %280 = vmatpush.msra.mxu0 0.0
    %281 = vmatpush.msra.mxu0 0.0
    %282 = vmatpush.msra.mxu0 0.0
    %283 = vmatpush.msra.mxu0 0.0
    %284 = vmatpush.msra.mxu0 0.0
    %285 = vmatpush.msra.mxu0 0.0
    %286 = vmatpush.msra.mxu0 %v151
    %287 = vmatpush.msra.mxu0 %v150
    %288 = vmatpush.msra.mxu0 %v149
    %289 = vmatpush.msra.mxu0 %v148
    %290 = vmatpush.msra.mxu0 %v147
    %291 = vmatpush.msra.mxu0 %v146
    %292 = vmatpush.msra.mxu0 %v145
    %293 = vmatpush.msra.mxu0 %v144
    %294 = vmatmul.f32.gmra.mxu0 %v153
    %v295 = vpop.f32.mrf.mxu0
    %v296 = vadd.f32 0.0, %v295
    %297 = vmatmul.f32.gmra.mxu0 %v156
    %v298 = vpop.f32.mrf.mxu0
    %v299 = vadd.f32 0.0, %v298
    %300 = vmatmul.f32.gmra.mxu0 %v159
    %v301 = vpop.f32.mrf.mxu0
    %v302 = vadd.f32 0.0, %v301
    %303 = vmatmul.f32.gmra.mxu0 %v162
    %v304 = vpop.f32.mrf.mxu0
    %v305 = vadd.f32 0.0, %v304
    %306 = vdwg.mxu0
    %v308 = vsel %vm55, %v274, 0
    %v311 = vsel %vm55, %v275, 0
    %v314 = vsel %vm55, %v276, 0
    %v317 = vsel %vm55, %v277, 0
    %319 = vmatpush.msra.mxu0 0.0
    %320 = vmatpush.msra.mxu0 0.0
    %321 = vmatpush.msra.mxu0 0.0
    %322 = vmatpush.msra.mxu0 0.0
    %323 = vmatpush.msra.mxu0 0.0
    %324 = vmatpush.msra.mxu0 0.0
    %325 = vmatpush.msra.mxu0 0.0
    %326 = vmatpush.msra.mxu0 0.0
    %327 = vmatpush.msra.mxu0 0.0
    %328 = vmatpush.msra.mxu0 0.0
    %329 = vmatpush.msra.mxu0 0.0
    %330 = vmatpush.msra.mxu0 0.0
    %331 = vmatpush.msra.mxu0 %v305
    %332 = vmatpush.msra.mxu0 %v302
    %333 = vmatpush.msra.mxu0 %v299
    %334 = vmatpush.msra.mxu0 %v296
    %335 = vmatmul.f32.gmra.mxu0 %v308
    %v336 = vpop.f32.mrf.mxu0
    %v337 = vadd.f32 0.0, %v336
    %338 = vmatmul.f32.gmra.mxu0 %v311
    %v339 = vpop.f32.mrf.mxu0
    %v340 = vadd.f32 0.0, %v339
    %341 = vmatmul.f32.gmra.mxu0 %v314
    %v342 = vpop.f32.mrf.mxu0
    %v343 = vadd.f32 0.0, %v342
    %344 = vmatmul.f32.gmra.mxu0 %v317
    %v345 = vpop.f32.mrf.mxu0
    %v346 = vadd.f32 0.0, %v345
    %347 = vdwg.mxu0
    %v348 = vadd.f32 %v337, %v343
    %v349 = vadd.f32 %v340, %v346
    %v350 = vadd.f32 %v348, %v111
    %v351 = vadd.f32 %v349, %v112
    %v352 = vsel %vm55, %v350, 0.0
    %353 = vadd.xlane.f32.xlu0 %v352
    %v354 = vpop.xlane.xlu0 %353
    %v355 = vsel %vm55, %v351, 0.0
    %356 = vadd.xlane.f32.xlu0 %v355
    %v357 = vpop.xlane.xlu0 %356
    %v358 = vmul.f32 %v354, %v68
    %v359 = vmul.f32 %v357, %v68
    %v360 = vsub.f32 %v350, %v358
    %v361 = vsub.f32 %v351, %v359
    %v362 = vmul.f32 %v360, %v360
    %v363 = vmul.f32 %v361, %v361
    %v364 = vsel %vm55, %v362, 0.0
    %365 = vadd.xlane.f32.xlu0 %v364
    %v366 = vpop.xlane.xlu0 %365
    %v367 = vsel %vm55, %v363, 0.0
    %368 = vadd.xlane.f32.xlu0 %v367
    %v369 = vpop.xlane.xlu0 %368
    %v370 = vmul.f32 %v366, %v68
    %v371 = vmul.f32 %v369, %v68
    %v372 = vadd.f32 %v370, 1e-06
    %v373 = vadd.f32 %v371, 1e-06
    %v374 = vrsqrt.pop %v372
    %v375 = vmul.f32 %v374, %v372
    %v376 = vmul.f32 %v375, %v374
    %v377 = vmul.f32 0.5, %v376
    %v378 = vsub.f32 1.5, %v377
    %v379 = vmul.f32 %v374, %v378
    %vm380 = vweird.f32 %v372
    %vm381 = vweird.f32 %v374
    %vm382 = vmor %vm380, %vm381
    %v383 = vsel %vm382, %v374, %v379
    %v384 = vrsqrt.pop %v373
    %v385 = vmul.f32 %v384, %v373
    %v386 = vmul.f32 %v385, %v384
    %v387 = vmul.f32 0.5, %v386
    %v388 = vsub.f32 1.5, %v387
    %v389 = vmul.f32 %v384, %v388
    %vm390 = vweird.f32 %v373
    %vm391 = vweird.f32 %v384
    %vm392 = vmor %vm390, %vm391
    %v393 = vsel %vm392, %v384, %v389
    %v394 = vmul.f32 %v360, %v383
    %v395 = vmul.f32 %v361, %v393
    %v396 = vperm.slane %v118, 0
    %v397 = vmul.f32 %v394, %v396
    %v398 = vmul.f32 %v395, %v396
    %v399 = vperm.slane %v118, 1
    %v400 = vadd.f32 %v397, %v399
    %v401 = vadd.f32 %v398, %v399
    %402 = vst.msk [vmem:[#allocation2] sm:$0xff] %vm55, %v400
    %403 = vst.msk [vmem:[#allocation2 + $0x8] sm:$0xff] %vm55, %v401
    %406 = vrot.lane.b32.xlu0 %v400, 32
    %v407 = vpop.permute.xlu0 %406
    %408 = vrot.lane.b32.xlu0 %v401, 32
    %v409 = vpop.permute.xlu0 %408
    %412 = vst.msk [vmem:[#allocation2 + $0x10] sm:$0xff] %vm129, %v407
    %413 = vst.msk [vmem:[#allocation2 + $0x18] sm:$0xff] %vm129, %v409
    %v414 = vld [vmem:[#allocation2] sm:$0xff]
    %v415 = vld [vmem:[#allocation2 + $0x8] sm:$0xff]
    %v416 = vld [vmem:[#allocation2 + $0x10] sm:$0xff]
    %v417 = vld [vmem:[#allocation2 + $0x18] sm:$0xff]
    %s418 = scalar_lea.vmem %s5, 64
    %v419 = vld [vmem:[%s418] sm:$0xff]
    %v420 = vld [vmem:[%s418 + $0x8] sm:$0xff]
    %v421 = vld [vmem:[%s418 + $0x10] sm:$0xff]
    %v422 = vld [vmem:[%s418 + $0x18] sm:$0xff]
    %v423 = vld [vmem:[%s418 + $0x20] sm:$0xff]
    %v424 = vld [vmem:[%s418 + $0x28] sm:$0xff]
    %v425 = vld [vmem:[%s418 + $0x30] sm:$0xff]
    %v426 = vld [vmem:[%s418 + $0x38] sm:$0xff]
    %s427 = scalar_lea.vmem %s6, 64
    %v428 = vld [vmem:[%s427] sm:$0xff]
    %v429 = vld [vmem:[%s427 + $0x8] sm:$0xff]
    %v430 = vld [vmem:[%s427 + $0x10] sm:$0xff]
    %v431 = vld [vmem:[%s427 + $0x18] sm:$0xff]
    %v432 = vld [vmem:[%s427 + $0x20] sm:$0xff]
    %v433 = vld [vmem:[%s427 + $0x28] sm:$0xff]
    %v434 = vld [vmem:[%s427 + $0x30] sm:$0xff]
    %v435 = vld [vmem:[%s427 + $0x38] sm:$0xff]
    %v437 = vsel %vm113, %v414, 0
    %v440 = vsel %vm113, %v415, 0
    %v443 = vsel %vm113, %v416, 0
    %v446 = vsel %vm113, %v417, 0
    %448 = vmatpush.msra.mxu0 0.0
    %449 = vmatpush.msra.mxu0 0.0
    %450 = vmatpush.msra.mxu0 0.0
    %451 = vmatpush.msra.mxu0 0.0
    %452 = vmatpush.msra.mxu0 0.0
    %453 = vmatpush.msra.mxu0 0.0
    %454 = vmatpush.msra.mxu0 0.0
    %455 = vmatpush.msra.mxu0 0.0
    %456 = vmatpush.msra.mxu0 %v426
    %457 = vmatpush.msra.mxu0 %v425
    %458 = vmatpush.msra.mxu0 %v424
    %459 = vmatpush.msra.mxu0 %v423
    %460 = vmatpush.msra.mxu0 %v422
    %461 = vmatpush.msra.mxu0 %v421
    %462 = vmatpush.msra.mxu0 %v420
    %463 = vmatpush.msra.mxu0 %v419
    %464 = vmatmul.f32.gmra.mxu0 %v437
    %v465 = vpop.f32.mrf.mxu0
    %v466 = vadd.f32 0.0, %v465
    %467 = vmatmul.f32.gmra.mxu0 %v440
    %v468 = vpop.f32.mrf.mxu0
    %v469 = vadd.f32 0.0, %v468
    %470 = vmatmul.f32.gmra.mxu0 %v443
    %v471 = vpop.f32.mrf.mxu0
    %v472 = vadd.f32 0.0, %v471
    %473 = vmatmul.f32.gmra.mxu0 %v446
    %v474 = vpop.f32.mrf.mxu0
    %v475 = vadd.f32 0.0, %v474
    %476 = vdwg.mxu0
    %v478 = vsel %vm113, %v466, 0
    %v481 = vsel %vm113, %v469, 0
    %v484 = vsel %vm113, %v472, 0
    %v487 = vsel %vm113, %v475, 0
    %v490 = vsel %vm113, %v48, 0
    %v493 = vsel %vm113, %v49, 0
    %v496 = vsel %vm113, %v50, 0
    %v499 = vsel %vm113, %v51, 0
    %v502 = vsel %vm113, %v52, 0
    %504 = vmatpush.xpose.msra.mxu0 0.0
    %505 = vmatpush.xpose.msra.mxu0 0.0
    %506 = vmatpush.xpose.msra.mxu0 0.0
    %507 = vmatpush.xpose.msra.mxu0 0.0
    %508 = vmatpush.xpose.msra.mxu0 0.0
    %509 = vmatpush.xpose.msra.mxu0 0.0
    %510 = vmatpush.xpose.msra.mxu0 0.0
    %511 = vmatpush.xpose.msra.mxu0 0.0
    %512 = vmatpush.xpose.msra.mxu0 0.0
    %513 = vmatpush.xpose.msra.mxu0 0.0
    %514 = vmatpush.xpose.msra.mxu0 0.0
    %515 = vmatpush.xpose.msra.mxu0 %v502
    %516 = vmatpush.xpose.msra.mxu0 %v499
    %517 = vmatpush.xpose.msra.mxu0 %v496
    %518 = vmatpush.xpose.msra.mxu0 %v493
    %519 = vmatpush.xpose.msra.mxu0 %v490
    %520 = vmatmul.f32.gmra.mxu0 %v478
    %v521 = vpop.f32.mrf.mxu0
    %v522 = vadd.f32 %v44, %v521
    %523 = vmatmul.f32.gmra.mxu0 %v481
    %v524 = vpop.f32.mrf.mxu0
    %v525 = vadd.f32 %v45, %v524
    %526 = vmatmul.f32.gmra.mxu0 %v484
    %v527 = vpop.f32.mrf.mxu0
    %v528 = vadd.f32 %v46, %v527
    %529 = vmatmul.f32.gmra.mxu0 %v487
    %v530 = vpop.f32.mrf.mxu0
    %v531 = vadd.f32 %v47, %v530
    %532 = vdwg.mxu0
    %vm533 = vcmask 326656
    %v534 = vsel %vm533, %v522, -inf
    %535 = vmax.xlane.f32.xlu0 %v534
    %v536 = vpop.xlane.xlu0 %535
    %v537 = vsel %vm533, %v525, -inf
    %538 = vmax.xlane.f32.xlu0 %v537
    %v539 = vpop.xlane.xlu0 %538
    %v540 = vsel %vm533, %v528, -inf
    %541 = vmax.xlane.f32.xlu0 %v540
    %v542 = vpop.xlane.xlu0 %541
    %v543 = vsel %vm533, %v531, -inf
    %544 = vmax.xlane.f32.xlu0 %v543
    %v545 = vpop.xlane.xlu0 %544
    %v546 = vsub.f32 %v522, %v536
    %v547 = vsub.f32 %v525, %v539
    %v548 = vsub.f32 %v528, %v542
    %v549 = vsub.f32 %v531, %v545
    %v550 = vmul.f32 %v546, 1.442695
    %v551 = vpow.pop %v550
    %v552 = vmul.f32 %v547, 1.442695
    %v553 = vpow.pop %v552
    %v554 = vmul.f32 %v548, 1.442695
    %v555 = vpow.pop %v554
    %v556 = vmul.f32 %v549, 1.442695
    %v557 = vpow.pop %v556
    %v558 = vsel %vm533, %v551, 0.0
    %559 = vadd.xlane.f32.xlu0 %v558
    %v560 = vpop.xlane.xlu0 %559
    %v561 = vsel %vm533, %v553, 0.0
    %562 = vadd.xlane.f32.xlu0 %v561
    %v563 = vpop.xlane.xlu0 %562
    %v564 = vsel %vm533, %v555, 0.0
    %565 = vadd.xlane.f32.xlu0 %v564
    %v566 = vpop.xlane.xlu0 %565
    %v567 = vsel %vm533, %v557, 0.0
    %568 = vadd.xlane.f32.xlu0 %v567
    %v569 = vpop.xlane.xlu0 %568
    %v570 = vrcp.pop %v560
    %v571 = vrcp.pop %v563
    %v572 = vrcp.pop %v566
    %v573 = vrcp.pop %v569
    %v574 = vmul.f32 %v551, %v570
    %v575 = vmul.f32 %v553, %v571
    %v576 = vmul.f32 %v555, %v572
    %v577 = vmul.f32 %v557, %v573
    %578 = vmatpush.msra.mxu0 0.0
    %579 = vmatpush.msra.mxu0 0.0
    %580 = vmatpush.msra.mxu0 0.0
    %581 = vmatpush.msra.mxu0 0.0
    %582 = vmatpush.msra.mxu0 0.0
    %583 = vmatpush.msra.mxu0 0.0
    %584 = vmatpush.msra.mxu0 0.0
    %585 = vmatpush.msra.mxu0 0.0
    %586 = vmatpush.msra.mxu0 %v435
    %587 = vmatpush.msra.mxu0 %v434
    %588 = vmatpush.msra.mxu0 %v433
    %589 = vmatpush.msra.mxu0 %v432
    %590 = vmatpush.msra.mxu0 %v431
    %591 = vmatpush.msra.mxu0 %v430
    %592 = vmatpush.msra.mxu0 %v429
    %593 = vmatpush.msra.mxu0 %v428
    %594 = vmatmul.f32.gmra.mxu0 %v490
    %v595 = vpop.f32.mrf.mxu0
    %v596 = vadd.f32 0.0, %v595
    %597 = vmatmul.f32.gmra.mxu0 %v493
    %v598 = vpop.f32.mrf.mxu0
    %v599 = vadd.f32 0.0, %v598
    %600 = vmatmul.f32.gmra.mxu0 %v496
    %v601 = vpop.f32.mrf.mxu0
    %v602 = vadd.f32 0.0, %v601
    %603 = vmatmul.f32.gmra.mxu0 %v499
    %v604 = vpop.f32.mrf.mxu0
    %v605 = vadd.f32 0.0, %v604
    %606 = vmatmul.f32.gmra.mxu0 %v502
    %v607 = vpop.f32.mrf.mxu0
    %v608 = vadd.f32 0.0, %v607
    %609 = vdwg.mxu0
    %v611 = vsel %vm533, %v574, 0
    %v614 = vsel %vm533, %v575, 0
    %v617 = vsel %vm533, %v576, 0
    %v620 = vsel %vm533, %v577, 0
    %622 = vmatpush.msra.mxu0 0.0
    %623 = vmatpush.msra.mxu0 0.0
    %624 = vmatpush.msra.mxu0 0.0
    %625 = vmatpush.msra.mxu0 0.0
    %626 = vmatpush.msra.mxu0 0.0
    %627 = vmatpush.msra.mxu0 0.0
    %628 = vmatpush.msra.mxu0 0.0
    %629 = vmatpush.msra.mxu0 0.0
    %630 = vmatpush.msra.mxu0 0.0
    %631 = vmatpush.msra.mxu0 0.0
    %632 = vmatpush.msra.mxu0 0.0
    %633 = vmatpush.msra.mxu0 %v608
    %634 = vmatpush.msra.mxu0 %v605
    %635 = vmatpush.msra.mxu0 %v602
    %636 = vmatpush.msra.mxu0 %v599
    %637 = vmatpush.msra.mxu0 %v596
    %638 = vmatmul.f32.gmra.mxu0 %v611
    %v639 = vpop.f32.mrf.mxu0
    %v640 = vadd.f32 0.0, %v639
    %641 = vmatmul.f32.gmra.mxu0 %v614
    %v642 = vpop.f32.mrf.mxu0
    %v643 = vadd.f32 0.0, %v642
    %644 = vmatmul.f32.gmra.mxu0 %v617
    %v645 = vpop.f32.mrf.mxu0
    %v646 = vadd.f32 0.0, %v645
    %647 = vmatmul.f32.gmra.mxu0 %v620
    %v648 = vpop.f32.mrf.mxu0
    %v649 = vadd.f32 0.0, %v648
    %650 = vdwg.mxu0
    %v651 = vadd.f32 %v640, %v646
    %v652 = vadd.f32 %v643, %v649
    %v653 = vadd.f32 %v651, %v400
    %v654 = vadd.f32 %v652, %v401
    %v655 = vsel %vm55, %v653, 0.0
    %656 = vadd.xlane.f32.xlu0 %v655
    %v657 = vpop.xlane.xlu0 %656
    %v658 = vsel %vm55, %v654, 0.0
    %659 = vadd.xlane.f32.xlu0 %v658
    %v660 = vpop.xlane.xlu0 %659
    %v661 = vmul.f32 %v657, %v68
    %v662 = vmul.f32 %v660, %v68
    %v663 = vsub.f32 %v653, %v661
    %v664 = vsub.f32 %v654, %v662
    %v665 = vmul.f32 %v663, %v663
    %v666 = vmul.f32 %v664, %v664
    %v667 = vsel %vm55, %v665, 0.0
    %668 = vadd.xlane.f32.xlu0 %v667
    %v669 = vpop.xlane.xlu0 %668
    %v670 = vsel %vm55, %v666, 0.0
    %671 = vadd.xlane.f32.xlu0 %v670
    %v672 = vpop.xlane.xlu0 %671
    %v673 = vmul.f32 %v669, %v68
    %v674 = vmul.f32 %v672, %v68
    %v675 = vadd.f32 %v673, 1e-06
    %v676 = vadd.f32 %v674, 1e-06
    %v677 = vrsqrt.pop %v675
    %v678 = vmul.f32 %v677, %v675
    %v679 = vmul.f32 %v678, %v677
    %v680 = vmul.f32 0.5, %v679
    %v681 = vsub.f32 1.5, %v680
    %v682 = vmul.f32 %v677, %v681
    %vm683 = vweird.f32 %v675
    %vm684 = vweird.f32 %v677
    %vm685 = vmor %vm683, %vm684
    %v686 = vsel %vm685, %v677, %v682
    %v687 = vrsqrt.pop %v676
    %v688 = vmul.f32 %v687, %v676
    %v689 = vmul.f32 %v688, %v687
    %v690 = vmul.f32 0.5, %v689
    %v691 = vsub.f32 1.5, %v690
    %v692 = vmul.f32 %v687, %v691
    %vm693 = vweird.f32 %v676
    %vm694 = vweird.f32 %v687
    %vm695 = vmor %vm693, %vm694
    %v696 = vsel %vm695, %v687, %v692
    %v697 = vmul.f32 %v663, %v686
    %v698 = vmul.f32 %v664, %v696
    %v699 = vperm.slane %v118, 2
    %v700 = vmul.f32 %v697, %v699
    %v701 = vmul.f32 %v698, %v699
    %v702 = vperm.slane %v118, 3
    %v703 = vadd.f32 %v700, %v702
    %v704 = vadd.f32 %v701, %v702
    %v705 = vld [vmem:[%s7] sm:$0xff]
    %v706 = vld [vmem:[%s7 + $0x8] sm:$0xff]
    %v707 = vld [vmem:[%s7 + $0x10] sm:$0xff]
    %v708 = vld [vmem:[%s7 + $0x18] sm:$0xff]
    %v709 = vld [vmem:[%s10] sm:$0x1]
    %v711 = vperm.slane %v709, 0
    %v714 = vsel %vm55, %v703, 0
    %v717 = vsel %vm55, %v704, 0
    %719 = vmatpush.msra.mxu0 0.0
    %720 = vmatpush.msra.mxu0 0.0
    %721 = vmatpush.msra.mxu0 0.0
    %722 = vmatpush.msra.mxu0 0.0
    %723 = vmatpush.msra.mxu0 0.0
    %724 = vmatpush.msra.mxu0 0.0
    %725 = vmatpush.msra.mxu0 0.0
    %726 = vmatpush.msra.mxu0 0.0
    %727 = vmatpush.msra.mxu0 0.0
    %728 = vmatpush.msra.mxu0 0.0
    %729 = vmatpush.msra.mxu0 0.0
    %730 = vmatpush.msra.mxu0 0.0
    %731 = vmatpush.msra.mxu0 %v708
    %732 = vmatpush.msra.mxu0 %v707
    %733 = vmatpush.msra.mxu0 %v706
    %734 = vmatpush.msra.mxu0 %v705
    %735 = vmatmul.f32.gmra.mxu0 %v714
    %v736 = vpop.f32.mrf.mxu0
    %v737 = vadd.f32 %v711, %v736
    %738 = vmatmul.f32.gmra.mxu0 %v717
    %v739 = vpop.f32.mrf.mxu0
    %v740 = vadd.f32 %v711, %v739
    %741 = vdwg.mxu0
    %v742 = vmax.f32 %v737, 0.0
    %v743 = vmax.f32 %v740, 0.0
    %v744 = vld [vmem:[%s8] sm:$0xff]
    %v745 = vld [vmem:[%s8 + $0x8] sm:$0xff]
    %v746 = vld [vmem:[%s8 + $0x10] sm:$0xff]
    %v747 = vld [vmem:[%s8 + $0x18] sm:$0xff]
    %v748 = vld [vmem:[%s8 + $0x20] sm:$0xff]
    %v749 = vld [vmem:[%s8 + $0x28] sm:$0xff]
    %v750 = vld [vmem:[%s8 + $0x30] sm:$0xff]
    %v751 = vld [vmem:[%s8 + $0x38] sm:$0xff]
    %v752 = vperm.slane %v118, 6
    %v754 = vsel %vm113, %v742, 0
    %v757 = vsel %vm113, %v743, 0
    %759 = vmatpush.msra.mxu0 0.0
    %760 = vmatpush.msra.mxu0 0.0
    %761 = vmatpush.msra.mxu0 0.0
    %762 = vmatpush.msra.mxu0 0.0
    %763 = vmatpush.msra.mxu0 0.0
    %764 = vmatpush.msra.mxu0 0.0
    %765 = vmatpush.msra.mxu0 0.0
    %766 = vmatpush.msra.mxu0 0.0
    %767 = vmatpush.msra.mxu0 %v751
    %768 = vmatpush.msra.mxu0 %v750
    %769 = vmatpush.msra.mxu0 %v749
    %770 = vmatpush.msra.mxu0 %v748
    %771 = vmatpush.msra.mxu0 %v747
    %772 = vmatpush.msra.mxu0 %v746
    %773 = vmatpush.msra.mxu0 %v745
    %774 = vmatpush.msra.mxu0 %v744
    %775 = vmatmul.f32.gmra.mxu0 %v754
    %v776 = vpop.f32.mrf.mxu0
    %v777 = vadd.f32 %v752, %v776
    %778 = vmatmul.f32.gmra.mxu0 %v757
    %v779 = vpop.f32.mrf.mxu0
    %v780 = vadd.f32 %v752, %v779
    %781 = vdwg.mxu0
    %v782 = vadd.f32 %v777, %v703
    %v783 = vadd.f32 %v780, %v704
    %v784 = vsel %vm55, %v782, 0.0
    %785 = vadd.xlane.f32.xlu0 %v784
    %v786 = vpop.xlane.xlu0 %785
    %v787 = vsel %vm55, %v783, 0.0
    %788 = vadd.xlane.f32.xlu0 %v787
    %v789 = vpop.xlane.xlu0 %788
    %v790 = vmul.f32 %v786, %v68
    %v791 = vmul.f32 %v789, %v68
    %v792 = vsub.f32 %v782, %v790
    %v793 = vsub.f32 %v783, %v791
    %v794 = vmul.f32 %v792, %v792
    %v795 = vmul.f32 %v793, %v793
    %v796 = vsel %vm55, %v794, 0.0
    %797 = vadd.xlane.f32.xlu0 %v796
    %v798 = vpop.xlane.xlu0 %797
    %v799 = vsel %vm55, %v795, 0.0
    %800 = vadd.xlane.f32.xlu0 %v799
    %v801 = vpop.xlane.xlu0 %800
    %v802 = vmul.f32 %v798, %v68
    %v803 = vmul.f32 %v801, %v68
    %v804 = vadd.f32 %v802, 1e-06
    %v805 = vadd.f32 %v803, 1e-06
    %v806 = vrsqrt.pop %v804
    %v807 = vmul.f32 %v806, %v804
    %v808 = vmul.f32 %v807, %v806
    %v809 = vmul.f32 0.5, %v808
    %v810 = vsub.f32 1.5, %v809
    %v811 = vmul.f32 %v806, %v810
    %vm812 = vweird.f32 %v804
    %vm813 = vweird.f32 %v806
    %vm814 = vmor %vm812, %vm813
    %v815 = vsel %vm814, %v806, %v811
    %v816 = vrsqrt.pop %v805
    %v817 = vmul.f32 %v816, %v805
    %v818 = vmul.f32 %v817, %v816
    %v819 = vmul.f32 0.5, %v818
    %v820 = vsub.f32 1.5, %v819
    %v821 = vmul.f32 %v816, %v820
    %vm822 = vweird.f32 %v805
    %vm823 = vweird.f32 %v816
    %vm824 = vmor %vm822, %vm823
    %v825 = vsel %vm824, %v816, %v821
    %v826 = vmul.f32 %v792, %v815
    %v827 = vmul.f32 %v793, %v825
    %v828 = vperm.slane %v118, 4
    %v829 = vmul.f32 %v826, %v828
    %v830 = vmul.f32 %v827, %v828
    %v831 = vperm.slane %v118, 5
    %v832 = vadd.f32 %v829, %v831
    %v833 = vadd.f32 %v830, %v831
    %s834 = scalar_lea.vmem %s9, 8
    %v835 = vld [vmem:[%s834] sm:$0xff]
    %836 = vst.msk [vmem:[#allocation2] sm:$0xff] %vm55, %v832
    %837 = vst.msk [vmem:[#allocation2 + $0x8] sm:$0xff] %vm55, %v833
    %840 = vrot.lane.b32.xlu0 %v832, 32
    %v841 = vpop.permute.xlu0 %840
    %842 = vrot.lane.b32.xlu0 %v833, 32
    %v843 = vpop.permute.xlu0 %842
    %846 = vst.msk [vmem:[#allocation2 + $0x10] sm:$0xff] %vm129, %v841
    %847 = vst.msk [vmem:[#allocation2 + $0x18] sm:$0xff] %vm129, %v843
    %v848 = vld [vmem:[#allocation2] sm:$0xff]
    %v849 = vld [vmem:[#allocation2 + $0x8] sm:$0xff]
    %v850 = vld [vmem:[#allocation2 + $0x10] sm:$0xff]
    %v851 = vld [vmem:[#allocation2 + $0x18] sm:$0xff]
    %s852 = scalar_lea.vmem %s5, 128
    %v853 = vld [vmem:[%s852] sm:$0xff]
    %v854 = vld [vmem:[%s852 + $0x8] sm:$0xff]
    %v855 = vld [vmem:[%s852 + $0x10] sm:$0xff]
    %v856 = vld [vmem:[%s852 + $0x18] sm:$0xff]
    %v857 = vld [vmem:[%s852 + $0x20] sm:$0xff]
    %v858 = vld [vmem:[%s852 + $0x28] sm:$0xff]
    %v859 = vld [vmem:[%s852 + $0x30] sm:$0xff]
    %v860 = vld [vmem:[%s852 + $0x38] sm:$0xff]
    %s861 = scalar_lea.vmem %s6, 128
    %v862 = vld [vmem:[%s861] sm:$0xff]
    %v863 = vld [vmem:[%s861 + $0x8] sm:$0xff]
    %v864 = vld [vmem:[%s861 + $0x10] sm:$0xff]
    %v865 = vld [vmem:[%s861 + $0x18] sm:$0xff]
    %v866 = vld [vmem:[%s861 + $0x20] sm:$0xff]
    %v867 = vld [vmem:[%s861 + $0x28] sm:$0xff]
    %v868 = vld [vmem:[%s861 + $0x30] sm:$0xff]
    %v869 = vld [vmem:[%s861 + $0x38] sm:$0xff]
    %v871 = vsel %vm113, %v848, 0
    %v874 = vsel %vm113, %v849, 0
    %v877 = vsel %vm113, %v850, 0
    %v880 = vsel %vm113, %v851, 0
    %882 = vmatpush.msra.mxu0 0.0
    %883 = vmatpush.msra.mxu0 0.0
    %884 = vmatpush.msra.mxu0 0.0
    %885 = vmatpush.msra.mxu0 0.0
    %886 = vmatpush.msra.mxu0 0.0
    %887 = vmatpush.msra.mxu0 0.0
    %888 = vmatpush.msra.mxu0 0.0
    %889 = vmatpush.msra.mxu0 0.0
    %890 = vmatpush.msra.mxu0 %v860
    %891 = vmatpush.msra.mxu0 %v859
    %892 = vmatpush.msra.mxu0 %v858
    %893 = vmatpush.msra.mxu0 %v857
    %894 = vmatpush.msra.mxu0 %v856
    %895 = vmatpush.msra.mxu0 %v855
    %896 = vmatpush.msra.mxu0 %v854
    %897 = vmatpush.msra.mxu0 %v853
    %898 = vmatmul.f32.gmra.mxu0 %v871
    %v899 = vpop.f32.mrf.mxu0
    %v900 = vadd.f32 0.0, %v899
    %901 = vmatmul.f32.gmra.mxu0 %v874
    %v902 = vpop.f32.mrf.mxu0
    %v903 = vadd.f32 0.0, %v902
    %904 = vmatmul.f32.gmra.mxu0 %v877
    %v905 = vpop.f32.mrf.mxu0
    %v906 = vadd.f32 0.0, %v905
    %907 = vmatmul.f32.gmra.mxu0 %v880
    %v908 = vpop.f32.mrf.mxu0
    %v909 = vadd.f32 0.0, %v908
    %910 = vdwg.mxu0
    %v912 = vsel %vm113, %v900, 0
    %v915 = vsel %vm113, %v903, 0
    %v918 = vsel %vm113, %v906, 0
    %v921 = vsel %vm113, %v909, 0
    %923 = vmatpush.xpose.msra.mxu0 0.0
    %924 = vmatpush.xpose.msra.mxu0 0.0
    %925 = vmatpush.xpose.msra.mxu0 0.0
    %926 = vmatpush.xpose.msra.mxu0 0.0
    %927 = vmatpush.xpose.msra.mxu0 0.0
    %928 = vmatpush.xpose.msra.mxu0 0.0
    %929 = vmatpush.xpose.msra.mxu0 0.0
    %930 = vmatpush.xpose.msra.mxu0 0.0
    %931 = vmatpush.xpose.msra.mxu0 0.0
    %932 = vmatpush.xpose.msra.mxu0 0.0
    %933 = vmatpush.xpose.msra.mxu0 0.0
    %934 = vmatpush.xpose.msra.mxu0 0.0
    %935 = vmatpush.xpose.msra.mxu0 %v880
    %936 = vmatpush.xpose.msra.mxu0 %v877
    %937 = vmatpush.xpose.msra.mxu0 %v874
    %938 = vmatpush.xpose.msra.mxu0 %v871
    %939 = vmatmul.f32.gmra.mxu0 %v912
    %v940 = vpop.f32.mrf.mxu0
    %v941 = vadd.f32 %v40, %v940
    %942 = vmatmul.f32.gmra.mxu0 %v915
    %v943 = vpop.f32.mrf.mxu0
    %v944 = vadd.f32 %v41, %v943
    %945 = vmatmul.f32.gmra.mxu0 %v918
    %v946 = vpop.f32.mrf.mxu0
    %v947 = vadd.f32 %v42, %v946
    %948 = vmatmul.f32.gmra.mxu0 %v921
    %v949 = vpop.f32.mrf.mxu0
    %v950 = vadd.f32 %v43, %v949
    %951 = vdwg.mxu0
    %v952 = vsel %vm55, %v941, -inf
    %953 = vmax.xlane.f32.xlu0 %v952
    %v954 = vpop.xlane.xlu0 %953
    %v955 = vsel %vm55, %v944, -inf
    %956 = vmax.xlane.f32.xlu0 %v955
    %v957 = vpop.xlane.xlu0 %956
    %v958 = vsel %vm55, %v947, -inf
    %959 = vmax.xlane.f32.xlu0 %v958
    %v960 = vpop.xlane.xlu0 %959
    %v961 = vsel %vm55, %v950, -inf
    %962 = vmax.xlane.f32.xlu0 %v961
    %v963 = vpop.xlane.xlu0 %962
    %v964 = vsub.f32 %v941, %v954
    %v965 = vsub.f32 %v944, %v957
    %v966 = vsub.f32 %v947, %v960
    %v967 = vsub.f32 %v950, %v963
    %v968 = vmul.f32 %v964, 1.442695
    %v969 = vpow.pop %v968
    %v970 = vmul.f32 %v965, 1.442695
    %v971 = vpow.pop %v970
    %v972 = vmul.f32 %v966, 1.442695
    %v973 = vpow.pop %v972
    %v974 = vmul.f32 %v967, 1.442695
    %v975 = vpow.pop %v974
    %v976 = vsel %vm55, %v969, 0.0
    %977 = vadd.xlane.f32.xlu0 %v976
    %v978 = vpop.xlane.xlu0 %977
    %v979 = vsel %vm55, %v971, 0.0
    %980 = vadd.xlane.f32.xlu0 %v979
    %v981 = vpop.xlane.xlu0 %980
    %v982 = vsel %vm55, %v973, 0.0
    %983 = vadd.xlane.f32.xlu0 %v982
    %v984 = vpop.xlane.xlu0 %983
    %v985 = vsel %vm55, %v975, 0.0
    %986 = vadd.xlane.f32.xlu0 %v985
    %v987 = vpop.xlane.xlu0 %986
    %v988 = vrcp.pop %v978
    %v989 = vrcp.pop %v981
    %v990 = vrcp.pop %v984
    %v991 = vrcp.pop %v987
    %v992 = vmul.f32 %v969, %v988
    %v993 = vmul.f32 %v971, %v989
    %v994 = vmul.f32 %v973, %v990
    %v995 = vmul.f32 %v975, %v991
    %996 = vmatpush.msra.mxu0 0.0
    %997 = vmatpush.msra.mxu0 0.0
    %998 = vmatpush.msra.mxu0 0.0
    %999 = vmatpush.msra.mxu0 0.0
    %1000 = vmatpush.msra.mxu0 0.0
    %1001 = vmatpush.msra.mxu0 0.0
    %1002 = vmatpush.msra.mxu0 0.0
    %1003 = vmatpush.msra.mxu0 0.0
    %1004 = vmatpush.msra.mxu0 %v869
    %1005 = vmatpush.msra.mxu0 %v868
    %1006 = vmatpush.msra.mxu0 %v867
    %1007 = vmatpush.msra.mxu0 %v866
    %1008 = vmatpush.msra.mxu0 %v865
    %1009 = vmatpush.msra.mxu0 %v864
    %1010 = vmatpush.msra.mxu0 %v863
    %1011 = vmatpush.msra.mxu0 %v862
    %1012 = vmatmul.f32.gmra.mxu0 %v871
    %v1013 = vpop.f32.mrf.mxu0
    %v1014 = vadd.f32 0.0, %v1013
    %1015 = vmatmul.f32.gmra.mxu0 %v874
    %v1016 = vpop.f32.mrf.mxu0
    %v1017 = vadd.f32 0.0, %v1016
    %1018 = vmatmul.f32.gmra.mxu0 %v877
    %v1019 = vpop.f32.mrf.mxu0
    %v1020 = vadd.f32 0.0, %v1019
    %1021 = vmatmul.f32.gmra.mxu0 %v880
    %v1022 = vpop.f32.mrf.mxu0
    %v1023 = vadd.f32 0.0, %v1022
    %1024 = vdwg.mxu0
    %v1026 = vsel %vm55, %v992, 0
    %v1029 = vsel %vm55, %v993, 0
    %v1032 = vsel %vm55, %v994, 0
    %v1035 = vsel %vm55, %v995, 0
    %1037 = vmatpush.msra.mxu0 0.0
    %1038 = vmatpush.msra.mxu0 0.0
    %1039 = vmatpush.msra.mxu0 0.0
    %1040 = vmatpush.msra.mxu0 0.0
    %1041 = vmatpush.msra.mxu0 0.0
    %1042 = vmatpush.msra.mxu0 0.0
    %1043 = vmatpush.msra.mxu0 0.0
    %1044 = vmatpush.msra.mxu0 0.0
    %1045 = vmatpush.msra.mxu0 0.0
    %1046 = vmatpush.msra.mxu0 0.0
    %1047 = vmatpush.msra.mxu0 0.0
    %1048 = vmatpush.msra.mxu0 0.0
    %1049 = vmatpush.msra.mxu0 %v1023
    %1050 = vmatpush.msra.mxu0 %v1020
    %1051 = vmatpush.msra.mxu0 %v1017
    %1052 = vmatpush.msra.mxu0 %v1014
    %1053 = vmatmul.f32.gmra.mxu0 %v1026
    %v1054 = vpop.f32.mrf.mxu0
    %v1055 = vadd.f32 0.0, %v1054
    %1056 = vmatmul.f32.gmra.mxu0 %v1029
    %v1057 = vpop.f32.mrf.mxu0
    %v1058 = vadd.f32 0.0, %v1057
    %1059 = vmatmul.f32.gmra.mxu0 %v1032
    %v1060 = vpop.f32.mrf.mxu0
    %v1061 = vadd.f32 0.0, %v1060
    %1062 = vmatmul.f32.gmra.mxu0 %v1035
    %v1063 = vpop.f32.mrf.mxu0
    %v1064 = vadd.f32 0.0, %v1063
    %1065 = vdwg.mxu0
    %v1066 = vadd.f32 %v1055, %v1061
    %v1067 = vadd.f32 %v1058, %v1064
    %v1068 = vadd.f32 %v1066, %v832
    %v1069 = vadd.f32 %v1067, %v833
    %v1070 = vsel %vm55, %v1068, 0.0
    %1071 = vadd.xlane.f32.xlu0 %v1070
    %v1072 = vpop.xlane.xlu0 %1071
    %v1073 = vsel %vm55, %v1069, 0.0
    %1074 = vadd.xlane.f32.xlu0 %v1073
    %v1075 = vpop.xlane.xlu0 %1074
    %v1076 = vmul.f32 %v1072, %v68
    %v1077 = vmul.f32 %v1075, %v68
    %v1078 = vsub.f32 %v1068, %v1076
    %v1079 = vsub.f32 %v1069, %v1077
    %v1080 = vmul.f32 %v1078, %v1078
    %v1081 = vmul.f32 %v1079, %v1079
    %v1082 = vsel %vm55, %v1080, 0.0
    %1083 = vadd.xlane.f32.xlu0 %v1082
    %v1084 = vpop.xlane.xlu0 %1083
    %v1085 = vsel %vm55, %v1081, 0.0
    %1086 = vadd.xlane.f32.xlu0 %v1085
    %v1087 = vpop.xlane.xlu0 %1086
    %v1088 = vmul.f32 %v1084, %v68
    %v1089 = vmul.f32 %v1087, %v68
    %v1090 = vadd.f32 %v1088, 1e-06
    %v1091 = vadd.f32 %v1089, 1e-06
    %v1092 = vrsqrt.pop %v1090
    %v1093 = vmul.f32 %v1092, %v1090
    %v1094 = vmul.f32 %v1093, %v1092
    %v1095 = vmul.f32 0.5, %v1094
    %v1096 = vsub.f32 1.5, %v1095
    %v1097 = vmul.f32 %v1092, %v1096
    %vm1098 = vweird.f32 %v1090
    %vm1099 = vweird.f32 %v1092
    %vm1100 = vmor %vm1098, %vm1099
    %v1101 = vsel %vm1100, %v1092, %v1097
    %v1102 = vrsqrt.pop %v1091
    %v1103 = vmul.f32 %v1102, %v1091
    %v1104 = vmul.f32 %v1103, %v1102
    %v1105 = vmul.f32 0.5, %v1104
    %v1106 = vsub.f32 1.5, %v1105
    %v1107 = vmul.f32 %v1102, %v1106
    %vm1108 = vweird.f32 %v1091
    %vm1109 = vweird.f32 %v1102
    %vm1110 = vmor %vm1108, %vm1109
    %v1111 = vsel %vm1110, %v1102, %v1107
    %v1112 = vmul.f32 %v1078, %v1101
    %v1113 = vmul.f32 %v1079, %v1111
    %v1114 = vperm.slane %v835, 0
    %v1115 = vmul.f32 %v1112, %v1114
    %v1116 = vmul.f32 %v1113, %v1114
    %v1117 = vperm.slane %v835, 1
    %v1118 = vadd.f32 %v1115, %v1117
    %v1119 = vadd.f32 %v1116, %v1117
    %1120 = vst.msk [vmem:[#allocation2] sm:$0xff] %vm55, %v1118
    %1121 = vst.msk [vmem:[#allocation2 + $0x8] sm:$0xff] %vm55, %v1119
    %1124 = vrot.lane.b32.xlu0 %v1118, 32
    %v1125 = vpop.permute.xlu0 %1124
    %1126 = vrot.lane.b32.xlu0 %v1119, 32
    %v1127 = vpop.permute.xlu0 %1126
    %1130 = vst.msk [vmem:[#allocation2 + $0x10] sm:$0xff] %vm129, %v1125
    %1131 = vst.msk [vmem:[#allocation2 + $0x18] sm:$0xff] %vm129, %v1127
    %v1132 = vld [vmem:[#allocation2] sm:$0xff]
    %v1133 = vld [vmem:[#allocation2 + $0x8] sm:$0xff]
    %v1134 = vld [vmem:[#allocation2 + $0x10] sm:$0xff]
    %v1135 = vld [vmem:[#allocation2 + $0x18] sm:$0xff]
    %s1136 = scalar_lea.vmem %s5, 192
    %v1137 = vld [vmem:[%s1136] sm:$0xff]
    %v1138 = vld [vmem:[%s1136 + $0x8] sm:$0xff]
    %v1139 = vld [vmem:[%s1136 + $0x10] sm:$0xff]
    %v1140 = vld [vmem:[%s1136 + $0x18] sm:$0xff]
    %v1141 = vld [vmem:[%s1136 + $0x20] sm:$0xff]
    %v1142 = vld [vmem:[%s1136 + $0x28] sm:$0xff]
    %v1143 = vld [vmem:[%s1136 + $0x30] sm:$0xff]
    %v1144 = vld [vmem:[%s1136 + $0x38] sm:$0xff]
    %s1145 = scalar_lea.vmem %s6, 192
    %v1146 = vld [vmem:[%s1145] sm:$0xff]
    %v1147 = vld [vmem:[%s1145 + $0x8] sm:$0xff]
    %v1148 = vld [vmem:[%s1145 + $0x10] sm:$0xff]
    %v1149 = vld [vmem:[%s1145 + $0x18] sm:$0xff]
    %v1150 = vld [vmem:[%s1145 + $0x20] sm:$0xff]
    %v1151 = vld [vmem:[%s1145 + $0x28] sm:$0xff]
    %v1152 = vld [vmem:[%s1145 + $0x30] sm:$0xff]
    %v1153 = vld [vmem:[%s1145 + $0x38] sm:$0xff]
    %v1155 = vsel %vm113, %v1132, 0
    %v1158 = vsel %vm113, %v1133, 0
    %v1161 = vsel %vm113, %v1134, 0
    %v1164 = vsel %vm113, %v1135, 0
    %1166 = vmatpush.msra.mxu0 0.0
    %1167 = vmatpush.msra.mxu0 0.0
    %1168 = vmatpush.msra.mxu0 0.0
    %1169 = vmatpush.msra.mxu0 0.0
    %1170 = vmatpush.msra.mxu0 0.0
    %1171 = vmatpush.msra.mxu0 0.0
    %1172 = vmatpush.msra.mxu0 0.0
    %1173 = vmatpush.msra.mxu0 0.0
    %1174 = vmatpush.msra.mxu0 %v1144
    %1175 = vmatpush.msra.mxu0 %v1143
    %1176 = vmatpush.msra.mxu0 %v1142
    %1177 = vmatpush.msra.mxu0 %v1141
    %1178 = vmatpush.msra.mxu0 %v1140
    %1179 = vmatpush.msra.mxu0 %v1139
    %1180 = vmatpush.msra.mxu0 %v1138
    %1181 = vmatpush.msra.mxu0 %v1137
    %1182 = vmatmul.f32.gmra.mxu0 %v1155
    %v1183 = vpop.f32.mrf.mxu0
    %v1184 = vadd.f32 0.0, %v1183
    %1185 = vmatmul.f32.gmra.mxu0 %v1158
    %v1186 = vpop.f32.mrf.mxu0
    %v1187 = vadd.f32 0.0, %v1186
    %1188 = vmatmul.f32.gmra.mxu0 %v1161
    %v1189 = vpop.f32.mrf.mxu0
    %v1190 = vadd.f32 0.0, %v1189
    %1191 = vmatmul.f32.gmra.mxu0 %v1164
    %v1192 = vpop.f32.mrf.mxu0
    %v1193 = vadd.f32 0.0, %v1192
    %1194 = vdwg.mxu0
    %v1196 = vsel %vm113, %v1184, 0
    %v1199 = vsel %vm113, %v1187, 0
    %v1202 = vsel %vm113, %v1190, 0
    %v1205 = vsel %vm113, %v1193, 0
    %1207 = vmatpush.xpose.msra.mxu0 0.0
    %1208 = vmatpush.xpose.msra.mxu0 0.0
    %1209 = vmatpush.xpose.msra.mxu0 0.0
    %1210 = vmatpush.xpose.msra.mxu0 0.0
    %1211 = vmatpush.xpose.msra.mxu0 0.0
    %1212 = vmatpush.xpose.msra.mxu0 0.0
    %1213 = vmatpush.xpose.msra.mxu0 0.0
    %1214 = vmatpush.xpose.msra.mxu0 0.0
    %1215 = vmatpush.xpose.msra.mxu0 0.0
    %1216 = vmatpush.xpose.msra.mxu0 0.0
    %1217 = vmatpush.xpose.msra.mxu0 0.0
    %1218 = vmatpush.xpose.msra.mxu0 %v502
    %1219 = vmatpush.xpose.msra.mxu0 %v499
    %1220 = vmatpush.xpose.msra.mxu0 %v496
    %1221 = vmatpush.xpose.msra.mxu0 %v493
    %1222 = vmatpush.xpose.msra.mxu0 %v490
    %1223 = vmatmul.f32.gmra.mxu0 %v1196
    %v1224 = vpop.f32.mrf.mxu0
    %v1225 = vadd.f32 %v44, %v1224
    %1226 = vmatmul.f32.gmra.mxu0 %v1199
    %v1227 = vpop.f32.mrf.mxu0
    %v1228 = vadd.f32 %v45, %v1227
    %1229 = vmatmul.f32.gmra.mxu0 %v1202
    %v1230 = vpop.f32.mrf.mxu0
    %v1231 = vadd.f32 %v46, %v1230
    %1232 = vmatmul.f32.gmra.mxu0 %v1205
    %v1233 = vpop.f32.mrf.mxu0
    %v1234 = vadd.f32 %v47, %v1233
    %1235 = vdwg.mxu0
    %v1236 = vsel %vm533, %v1225, -inf
    %1237 = vmax.xlane.f32.xlu0 %v1236
    %v1238 = vpop.xlane.xlu0 %1237
    %v1239 = vsel %vm533, %v1228, -inf
    %1240 = vmax.xlane.f32.xlu0 %v1239
    %v1241 = vpop.xlane.xlu0 %1240
    %v1242 = vsel %vm533, %v1231, -inf
    %1243 = vmax.xlane.f32.xlu0 %v1242
    %v1244 = vpop.xlane.xlu0 %1243
    %v1245 = vsel %vm533, %v1234, -inf
    %1246 = vmax.xlane.f32.xlu0 %v1245
    %v1247 = vpop.xlane.xlu0 %1246
    %v1248 = vsub.f32 %v1225, %v1238
    %v1249 = vsub.f32 %v1228, %v1241
    %v1250 = vsub.f32 %v1231, %v1244
    %v1251 = vsub.f32 %v1234, %v1247
    %v1252 = vmul.f32 %v1248, 1.442695
    %v1253 = vpow.pop %v1252
    %v1254 = vmul.f32 %v1249, 1.442695
    %v1255 = vpow.pop %v1254
    %v1256 = vmul.f32 %v1250, 1.442695
    %v1257 = vpow.pop %v1256
    %v1258 = vmul.f32 %v1251, 1.442695
    %v1259 = vpow.pop %v1258
    %v1260 = vsel %vm533, %v1253, 0.0
    %1261 = vadd.xlane.f32.xlu0 %v1260
    %v1262 = vpop.xlane.xlu0 %1261
    %v1263 = vsel %vm533, %v1255, 0.0
    %1264 = vadd.xlane.f32.xlu0 %v1263
    %v1265 = vpop.xlane.xlu0 %1264
    %v1266 = vsel %vm533, %v1257, 0.0
    %1267 = vadd.xlane.f32.xlu0 %v1266
    %v1268 = vpop.xlane.xlu0 %1267
    %v1269 = vsel %vm533, %v1259, 0.0
    %1270 = vadd.xlane.f32.xlu0 %v1269
    %v1271 = vpop.xlane.xlu0 %1270
    %v1272 = vrcp.pop %v1262
    %v1273 = vrcp.pop %v1265
    %v1274 = vrcp.pop %v1268
    %v1275 = vrcp.pop %v1271
    %v1276 = vmul.f32 %v1253, %v1272
    %v1277 = vmul.f32 %v1255, %v1273
    %v1278 = vmul.f32 %v1257, %v1274
    %v1279 = vmul.f32 %v1259, %v1275
    %1280 = vmatpush.msra.mxu0 0.0
    %1281 = vmatpush.msra.mxu0 0.0
    %1282 = vmatpush.msra.mxu0 0.0
    %1283 = vmatpush.msra.mxu0 0.0
    %1284 = vmatpush.msra.mxu0 0.0
    %1285 = vmatpush.msra.mxu0 0.0
    %1286 = vmatpush.msra.mxu0 0.0
    %1287 = vmatpush.msra.mxu0 0.0
    %1288 = vmatpush.msra.mxu0 %v1153
    %1289 = vmatpush.msra.mxu0 %v1152
    %1290 = vmatpush.msra.mxu0 %v1151
    %1291 = vmatpush.msra.mxu0 %v1150
    %1292 = vmatpush.msra.mxu0 %v1149
    %1293 = vmatpush.msra.mxu0 %v1148
    %1294 = vmatpush.msra.mxu0 %v1147
    %1295 = vmatpush.msra.mxu0 %v1146
    %1296 = vmatmul.f32.gmra.mxu0 %v490
    %v1297 = vpop.f32.mrf.mxu0
    %v1298 = vadd.f32 0.0, %v1297
    %1299 = vmatmul.f32.gmra.mxu0 %v493
    %v1300 = vpop.f32.mrf.mxu0
    %v1301 = vadd.f32 0.0, %v1300
    %1302 = vmatmul.f32.gmra.mxu0 %v496
    %v1303 = vpop.f32.mrf.mxu0
    %v1304 = vadd.f32 0.0, %v1303
    %1305 = vmatmul.f32.gmra.mxu0 %v499
    %v1306 = vpop.f32.mrf.mxu0
    %v1307 = vadd.f32 0.0, %v1306
    %1308 = vmatmul.f32.gmra.mxu0 %v502
    %v1309 = vpop.f32.mrf.mxu0
    %v1310 = vadd.f32 0.0, %v1309
    %1311 = vdwg.mxu0
    %v1313 = vsel %vm533, %v1276, 0
    %v1316 = vsel %vm533, %v1277, 0
    %v1319 = vsel %vm533, %v1278, 0
    %v1322 = vsel %vm533, %v1279, 0
    %1324 = vmatpush.msra.mxu0 0.0
    %1325 = vmatpush.msra.mxu0 0.0
    %1326 = vmatpush.msra.mxu0 0.0
    %1327 = vmatpush.msra.mxu0 0.0
    %1328 = vmatpush.msra.mxu0 0.0
    %1329 = vmatpush.msra.mxu0 0.0
    %1330 = vmatpush.msra.mxu0 0.0
    %1331 = vmatpush.msra.mxu0 0.0
    %1332 = vmatpush.msra.mxu0 0.0
    %1333 = vmatpush.msra.mxu0 0.0
    %1334 = vmatpush.msra.mxu0 0.0
    %1335 = vmatpush.msra.mxu0 %v1310
    %1336 = vmatpush.msra.mxu0 %v1307
    %1337 = vmatpush.msra.mxu0 %v1304
    %1338 = vmatpush.msra.mxu0 %v1301
    %1339 = vmatpush.msra.mxu0 %v1298
    %1340 = vmatmul.f32.gmra.mxu0 %v1313
    %v1341 = vpop.f32.mrf.mxu0
    %v1342 = vadd.f32 0.0, %v1341
    %1343 = vmatmul.f32.gmra.mxu0 %v1316
    %v1344 = vpop.f32.mrf.mxu0
    %v1345 = vadd.f32 0.0, %v1344
    %1346 = vmatmul.f32.gmra.mxu0 %v1319
    %v1347 = vpop.f32.mrf.mxu0
    %v1348 = vadd.f32 0.0, %v1347
    %1349 = vmatmul.f32.gmra.mxu0 %v1322
    %v1350 = vpop.f32.mrf.mxu0
    %v1351 = vadd.f32 0.0, %v1350
    %1352 = vdwg.mxu0
    %v1353 = vadd.f32 %v1342, %v1348
    %v1354 = vadd.f32 %v1345, %v1351
    %v1355 = vadd.f32 %v1353, %v1118
    %v1356 = vadd.f32 %v1354, %v1119
    %v1357 = vsel %vm55, %v1355, 0.0
    %1358 = vadd.xlane.f32.xlu0 %v1357
    %v1359 = vpop.xlane.xlu0 %1358
    %v1360 = vsel %vm55, %v1356, 0.0
    %1361 = vadd.xlane.f32.xlu0 %v1360
    %v1362 = vpop.xlane.xlu0 %1361
    %v1363 = vmul.f32 %v1359, %v68
    %v1364 = vmul.f32 %v1362, %v68
    %v1365 = vsub.f32 %v1355, %v1363
    %v1366 = vsub.f32 %v1356, %v1364
    %v1367 = vmul.f32 %v1365, %v1365
    %v1368 = vmul.f32 %v1366, %v1366
    %v1369 = vsel %vm55, %v1367, 0.0
    %1370 = vadd.xlane.f32.xlu0 %v1369
    %v1371 = vpop.xlane.xlu0 %1370
    %v1372 = vsel %vm55, %v1368, 0.0
    %1373 = vadd.xlane.f32.xlu0 %v1372
    %v1374 = vpop.xlane.xlu0 %1373
    %v1375 = vmul.f32 %v1371, %v68
    %v1376 = vmul.f32 %v1374, %v68
    %v1377 = vadd.f32 %v1375, 1e-06
    %v1378 = vadd.f32 %v1376, 1e-06
    %v1379 = vrsqrt.pop %v1377
    %v1380 = vmul.f32 %v1379, %v1377
    %v1381 = vmul.f32 %v1380, %v1379
    %v1382 = vmul.f32 0.5, %v1381
    %v1383 = vsub.f32 1.5, %v1382
    %v1384 = vmul.f32 %v1379, %v1383
    %vm1385 = vweird.f32 %v1377
    %vm1386 = vweird.f32 %v1379
    %vm1387 = vmor %vm1385, %vm1386
    %v1388 = vsel %vm1387, %v1379, %v1384
    %v1389 = vrsqrt.pop %v1378
    %v1390 = vmul.f32 %v1389, %v1378
    %v1391 = vmul.f32 %v1390, %v1389
    %v1392 = vmul.f32 0.5, %v1391
    %v1393 = vsub.f32 1.5, %v1392
    %v1394 = vmul.f32 %v1389, %v1393
    %vm1395 = vweird.f32 %v1378
    %vm1396 = vweird.f32 %v1389
    %vm1397 = vmor %vm1395, %vm1396
    %v1398 = vsel %vm1397, %v1389, %v1394
    %v1399 = vmul.f32 %v1365, %v1388
    %v1400 = vmul.f32 %v1366, %v1398
    %v1401 = vperm.slane %v835, 2
    %v1402 = vmul.f32 %v1399, %v1401
    %v1403 = vmul.f32 %v1400, %v1401
    %v1404 = vperm.slane %v835, 3
    %v1405 = vadd.f32 %v1402, %v1404
    %v1406 = vadd.f32 %v1403, %v1404
    %s1407 = scalar_lea.vmem %s7, 32
    %v1408 = vld [vmem:[%s1407] sm:$0xff]
    %v1409 = vld [vmem:[%s1407 + $0x8] sm:$0xff]
    %v1410 = vld [vmem:[%s1407 + $0x10] sm:$0xff]
    %v1411 = vld [vmem:[%s1407 + $0x18] sm:$0xff]
    %s1412 = scalar_lea.vmem %s10, 1
    %v1413 = vld [vmem:[%s1412] sm:$0x1]
    %v1415 = vperm.slane %v1413, 0
    %v1418 = vsel %vm55, %v1405, 0
    %v1421 = vsel %vm55, %v1406, 0
    %1423 = vmatpush.msra.mxu0 0.0
    %1424 = vmatpush.msra.mxu0 0.0
    %1425 = vmatpush.msra.mxu0 0.0
    %1426 = vmatpush.msra.mxu0 0.0
    %1427 = vmatpush.msra.mxu0 0.0
    %1428 = vmatpush.msra.mxu0 0.0
    %1429 = vmatpush.msra.mxu0 0.0
    %1430 = vmatpush.msra.mxu0 0.0
    %1431 = vmatpush.msra.mxu0 0.0
    %1432 = vmatpush.msra.mxu0 0.0
    %1433 = vmatpush.msra.mxu0 0.0
    %1434 = vmatpush.msra.mxu0 0.0
    %1435 = vmatpush.msra.mxu0 %v1411
    %1436 = vmatpush.msra.mxu0 %v1410
    %1437 = vmatpush.msra.mxu0 %v1409
    %1438 = vmatpush.msra.mxu0 %v1408
    %1439 = vmatmul.f32.gmra.mxu0 %v1418
    %v1440 = vpop.f32.mrf.mxu0
    %v1441 = vadd.f32 %v1415, %v1440
    %1442 = vmatmul.f32.gmra.mxu0 %v1421
    %v1443 = vpop.f32.mrf.mxu0
    %v1444 = vadd.f32 %v1415, %v1443
    %1445 = vdwg.mxu0
    %v1446 = vmax.f32 %v1441, 0.0
    %v1447 = vmax.f32 %v1444, 0.0
    %s1448 = scalar_lea.vmem %s8, 64
    %v1449 = vld [vmem:[%s1448] sm:$0xff]
    %v1450 = vld [vmem:[%s1448 + $0x8] sm:$0xff]
    %v1451 = vld [vmem:[%s1448 + $0x10] sm:$0xff]
    %v1452 = vld [vmem:[%s1448 + $0x18] sm:$0xff]
    %v1453 = vld [vmem:[%s1448 + $0x20] sm:$0xff]
    %v1454 = vld [vmem:[%s1448 + $0x28] sm:$0xff]
    %v1455 = vld [vmem:[%s1448 + $0x30] sm:$0xff]
    %v1456 = vld [vmem:[%s1448 + $0x38] sm:$0xff]
    %v1457 = vperm.slane %v835, 6
    %v1459 = vsel %vm113, %v1446, 0
    %v1462 = vsel %vm113, %v1447, 0
    %1464 = vmatpush.msra.mxu0 0.0
    %1465 = vmatpush.msra.mxu0 0.0
    %1466 = vmatpush.msra.mxu0 0.0
    %1467 = vmatpush.msra.mxu0 0.0
    %1468 = vmatpush.msra.mxu0 0.0
    %1469 = vmatpush.msra.mxu0 0.0
    %1470 = vmatpush.msra.mxu0 0.0
    %1471 = vmatpush.msra.mxu0 0.0
    %1472 = vmatpush.msra.mxu0 %v1456
    %1473 = vmatpush.msra.mxu0 %v1455
    %1474 = vmatpush.msra.mxu0 %v1454
    %1475 = vmatpush.msra.mxu0 %v1453
    %1476 = vmatpush.msra.mxu0 %v1452
    %1477 = vmatpush.msra.mxu0 %v1451
    %1478 = vmatpush.msra.mxu0 %v1450
    %1479 = vmatpush.msra.mxu0 %v1449
    %1480 = vmatmul.f32.gmra.mxu0 %v1459
    %v1481 = vpop.f32.mrf.mxu0
    %v1482 = vadd.f32 %v1457, %v1481
    %1483 = vmatmul.f32.gmra.mxu0 %v1462
    %v1484 = vpop.f32.mrf.mxu0
    %v1485 = vadd.f32 %v1457, %v1484
    %1486 = vdwg.mxu0
    %v1487 = vadd.f32 %v1482, %v1405
    %v1488 = vadd.f32 %v1485, %v1406
    %v1489 = vsel %vm55, %v1487, 0.0
    %1490 = vadd.xlane.f32.xlu0 %v1489
    %v1491 = vpop.xlane.xlu0 %1490
    %v1492 = vsel %vm55, %v1488, 0.0
    %1493 = vadd.xlane.f32.xlu0 %v1492
    %v1494 = vpop.xlane.xlu0 %1493
    %v1495 = vmul.f32 %v1491, %v68
    %v1496 = vmul.f32 %v1494, %v68
    %v1497 = vsub.f32 %v1487, %v1495
    %v1498 = vsub.f32 %v1488, %v1496
    %v1499 = vmul.f32 %v1497, %v1497
    %v1500 = vmul.f32 %v1498, %v1498
    %v1501 = vsel %vm55, %v1499, 0.0
    %1502 = vadd.xlane.f32.xlu0 %v1501
    %v1503 = vpop.xlane.xlu0 %1502
    %v1504 = vsel %vm55, %v1500, 0.0
    %1505 = vadd.xlane.f32.xlu0 %v1504
    %v1506 = vpop.xlane.xlu0 %1505
    %v1507 = vmul.f32 %v1503, %v68
    %v1508 = vmul.f32 %v1506, %v68
    %v1509 = vadd.f32 %v1507, 1e-06
    %v1510 = vadd.f32 %v1508, 1e-06
    %v1511 = vrsqrt.pop %v1509
    %v1512 = vmul.f32 %v1511, %v1509
    %v1513 = vmul.f32 %v1512, %v1511
    %v1514 = vmul.f32 0.5, %v1513
    %v1515 = vsub.f32 1.5, %v1514
    %v1516 = vmul.f32 %v1511, %v1515
    %vm1517 = vweird.f32 %v1509
    %vm1518 = vweird.f32 %v1511
    %vm1519 = vmor %vm1517, %vm1518
    %v1520 = vsel %vm1519, %v1511, %v1516
    %v1521 = vrsqrt.pop %v1510
    %v1522 = vmul.f32 %v1521, %v1510
    %v1523 = vmul.f32 %v1522, %v1521
    %v1524 = vmul.f32 0.5, %v1523
    %v1525 = vsub.f32 1.5, %v1524
    %v1526 = vmul.f32 %v1521, %v1525
    %vm1527 = vweird.f32 %v1510
    %vm1528 = vweird.f32 %v1521
    %vm1529 = vmor %vm1527, %vm1528
    %v1530 = vsel %vm1529, %v1521, %v1526
    %v1531 = vmul.f32 %v1497, %v1520
    %v1532 = vmul.f32 %v1498, %v1530
    %v1533 = vperm.slane %v835, 4
    %v1534 = vmul.f32 %v1531, %v1533
    %v1535 = vmul.f32 %v1532, %v1533
    %v1536 = vperm.slane %v835, 5
    %v1537 = vadd.f32 %v1534, %v1536
    %v1538 = vadd.f32 %v1535, %v1536
    %1539 = vst.msk [vmem:[#allocation3] sm:$0xff] %vm55, %v1537
    %1540 = vst.msk [vmem:[#allocation3 + $0x8] sm:$0xff] %vm55, %v1538
    // Predicated region
    $region46: #{decoder_forward.1} parent=1 // pred_check
      _
    $region47: #{decoder_forward.1} parent=1 // pred_check_branch
      %1542 = sbr.rel (0) target = $region49
    $region48: #{decoder_forward.1} parent=1 // pred_region
      %1544 = vsyncadd [#allocation4], 0
      %s1545 = sshll.u32 [#allocation3], 4
      %s1546 = int_to_ptr.vmem [resolvable:$true] %s1545
      %s1547 = sshll.u32 %s11, 4
      %s1548 = int_to_ptr.hbm [resolvable:$true] %s1547
      %1553 = dma.vmem_to_hbm [thread:$0]  %s1546, 256, %s1548, [#allocation4], 128, 128, 8
    $region49: #{decoder_forward.1} parent=1 // pred_fallthru
      _
    // Predicated region
    $region50: #{decoder_forward.1} parent=1 // pred_check
      _
    $region51: #{decoder_forward.1} parent=1 // pred_check_branch
      %1555 = sbr.rel (0) target = $region53
    $region52: #{decoder_forward.1} parent=1 // pred_region
      %1557 = dma.done [#allocation4], 256
    $region53: #{decoder_forward.1} parent=1 // pred_fallthru
      _
    %1558 = vsyncpa [#allocation4], 1

</llo_original>
